<compile_context>
chip_gen: v7x
topology: tpu7x:2x2x1
jax: 0.10.0
libtpu: 0.0.40
codegen_flags: <defaults>
</compile_context>

<pallas_src>
import functools
import math

import jax
import jax.numpy as jnp
from jax.experimental import pallas as pl
from jax.experimental.pallas import tpu as pltpu


# ----------------------------------------------------------------------------
# Fused kernel
# ----------------------------------------------------------------------------
def _fused_kernel(seq_ref, lp_ref, wqkv_ref, bqkv_ref, bo_ref, wbig_ref,
                  to1_ref, to2_ref,
                  seq_out_ref, lp_out_ref, lpm_ref, lps_ref, pm_ref, ps_ref,
                  *, W, seq_num, lp_num, label_num, pred_num, cout_p):
    Bt, L_seq, D = seq_ref.shape
    _, L_lp, _ = lp_ref.shape
    N = seq_num
    CP = cout_p
    R = 2 * Bt * N                       # stacked stat rows: (stream, batch, window)
    eps = 1e-5
    label_len = label_num * W
    pred_len = pred_num * W

    def window_norm(x, n, out_ref):
        # x: (Bt, n*W, D) -> store normalized block, return mean/std as (Bt*n, D)
        xw = x.reshape(Bt * n, W, D)                                   # layout-clean (W % 8 == 0)
        mean = jnp.mean(xw, axis=1, keepdims=True)                     # (Bt*n, 1, D)
        var = jnp.mean(xw * xw, axis=1, keepdims=True) - mean * mean   # single pass
        inv_std = jax.lax.rsqrt(var + eps)                             # EUP, no divide
        out_ref[...] = ((xw - mean) * inv_std).reshape(Bt, n * W, D).astype(out_ref.dtype)
        std = jnp.sqrt(var + eps)
        return mean[:, 0, :], std[:, 0, :]

    seq_mean, seq_std = window_norm(seq_ref[...].astype(jnp.float32), seq_num, seq_out_ref)
    lp_mean, lp_std = window_norm(lp_ref[...].astype(jnp.float32), lp_num, lp_out_ref)

    to1 = to1_ref[...]                    # (1, D)
    to2 = to2_ref[...]

    # ---- label-window part of the trade_off * window-repeat epilogue ----
    # (no dependence on attention/conv -> emitted early, DMA overlaps compute)
    if label_num > 0:
        m_all = jnp.broadcast_to((to1 * lp_mean)[:, None, :], (Bt * lp_num, W, D))
        s_all = jnp.broadcast_to((to2 * lp_std)[:, None, :], (Bt * lp_num, W, D))
        lpm_ref[:, pl.ds(0, label_len), :] = (
            m_all.reshape(Bt, L_lp, D)[:, :label_len, :].astype(lpm_ref.dtype))
        lps_ref[:, pl.ds(0, label_len), :] = (
            s_all.reshape(Bt, L_lp, D)[:, :label_len, :].astype(lps_ref.dtype))

    # ---- single-head attention on the stacked (2*Bt*N, D) stat rows ----
    x2 = jnp.concatenate([seq_mean, seq_std], axis=0)                  # (R, D)
    qkv = jnp.dot(x2, wqkv_ref[...],
                  preferred_element_type=jnp.float32) + bqkv_ref[...]  # (R, 3D)
    q = qkv[:, :D]
    k = qkv[:, D:2 * D]
    vw = qkv[:, 2 * D:]                   # V projection with Wo already folded in
    s = jax.lax.dot_general(q, k, (((1,), (1,)), ((), ())),
                            preferred_element_type=jnp.float32) * (1.0 / math.sqrt(D))
    # block-diagonal mask: rows attend iff they share a (batch, stream) group of N rows
    gr = jnp.floor(jax.lax.broadcasted_iota(jnp.int32, (R, 1), 0).astype(jnp.float32) / N)
    gc = jnp.floor(jax.lax.broadcasted_iota(jnp.int32, (1, R), 1).astype(jnp.float32) / N)
    s = jnp.where(gr == gc, s, -1e30)
    m = jnp.max(s, axis=-1, keepdims=True)
    p = jnp.exp(s - m)
    denom = jnp.sum(p, axis=-1, keepdims=True)
    out2 = (jnp.dot(p, vw, preferred_element_type=jnp.float32)
            * pl.reciprocal(denom, approx=False) + bo_ref[...])        # (R, D)

    # ---- ELU + both Conv1d(k=3, pad=1, bias=False) for all Bt batches
    #      as ONE matmul against a block-diagonal weight ----
    y = jnp.where(out2 > 0, out2, jnp.exp(jnp.minimum(out2, 0.0)) - 1.0)
    lane = jax.lax.broadcasted_iota(jnp.int32, (R, D), 1)
    y_left = jnp.where(lane == 0, 0.0, pltpu.roll(y, 1, axis=1))           # x[:, d-1]
    y_right = jnp.where(lane == D - 1, 0.0, pltpu.roll(y, D - 1, axis=1))  # x[:, d+1]
    taps = jnp.concatenate([y_left, y, y_right], axis=0)                   # (3R, D)
    conv_out = jnp.dot(wbig_ref[...], taps,
                       preferred_element_type=jnp.float32)                 # (2*Bt*CP, D)

    pm2 = conv_out[:Bt * CP, :]           # rows (batch, out_channel padded to CP)
    ps2 = conv_out[Bt * CP:, :]
    pm_ref[...] = pm2.reshape(Bt, CP, D)[:, :pred_num, :].astype(pm_ref.dtype)
    ps_ref[...] = ps2.reshape(Bt, CP, D)[:, :pred_num, :].astype(ps_ref.dtype)

    # ---- pred-window part of the trade_off * window-repeat epilogue ----
    m_exp = jnp.broadcast_to((to1 * pm2)[:, None, :], (Bt * CP, W, D))
    s_exp = jnp.broadcast_to((to2 * ps2)[:, None, :], (Bt * CP, W, D))
    lpm_ref[:, pl.ds(label_len, pred_len), :] = (
        m_exp.reshape(Bt, CP * W, D)[:, :pred_len, :].astype(lpm_ref.dtype))
    lps_ref[:, pl.ds(label_len, pred_len), :] = (
        s_exp.reshape(Bt, CP * W, D)[:, :pred_len, :].astype(lps_ref.dtype))


# ----------------------------------------------------------------------------
# Wrapper-side constant folding
# ----------------------------------------------------------------------------
def _build_conv_weight(wm, ws, bt, cout_p):
    """Block matrix folding both Conv1d ops over all bt batches into one matmul.

    Rows: (stream [mean, std], batch, out_channel padded to cout_p).
    Cols: (tap [d-1, d, d+1], stream, batch, in_channel) -- matches the
    tap-stacked operand concat([y_left, y, y_right], axis=0) in the kernel.
    """
    cout, cin, _ = wm.shape
    wm_p = jnp.zeros((cout_p, cin, 3), wm.dtype).at[:cout].set(wm)
    ws_p = jnp.zeros((cout_p, cin, 3), ws.dtype).at[:cout].set(ws)
    eye = jnp.eye(bt, dtype=wm.dtype)
    z = jnp.zeros((bt * cout_p, bt * cin), wm.dtype)
    blocks = []
    for t in range(3):
        m_t = jnp.kron(eye, wm_p[:, :, t])            # (bt*cout_p, bt*cin)
        s_t = jnp.kron(eye, ws_p[:, :, t])
        blocks.append(jnp.concatenate(
            [jnp.concatenate([m_t, z], axis=1),
             jnp.concatenate([z, s_t], axis=1)], axis=0))
    return jnp.concatenate(blocks, axis=1)            # (2*bt*cout_p, 6*bt*cin)


def _pick_batch_tile(B, seq_num, L_seq, L_lp, pred_num, D):
    # f32 in+out blocks per batch row, double-buffered by the pipeline.
    per_batch = 2 * 4 * D * (2 * L_seq + 4 * L_lp + 2 * pred_num)
    cap = max(1, (16 << 20) // max(per_batch, 1))
    # keep the block-diagonal masked score matrix <= 256 rows (bounded MXU waste)
    cap = min(cap, max(1, 128 // max(seq_num, 1)), 32)
    best = 1
    for bt in range(1, min(B, cap) + 1):
        # keep >= 2 grid steps so v7x's two TensorCores both get work
        if B % bt == 0 and (B // bt >= 2 or B == 1):
            best = bt
    return best


def distribution_block_forward(seq, label_pred, params, *, window_size, label_num):
    B, L_seq, D = seq.shape
    _, L_lp, _ = label_pred.shape
    W = window_size
    seq_num = L_seq // W
    lp_num = L_lp // W
    pred_num = lp_num - label_num
    # TODO(synk): window sizes with W % 8 != 0 (f32 sublane tile) need a per-window
    # fallback; the module default (24) and this test (8) both satisfy the constraint.
    assert W % 8 == 0, "vectorized window-norm assumes window_size % 8 == 0"

    Bt = _pick_batch_tile(B, seq_num, L_seq, L_lp, pred_num, D)
    cout_p = ((pred_num + 7) // 8) * 8    # conv out-channels padded to sublane tile

    # Constant glue, once per call: fused QKV weights with Wo folded into the V
    # projection ((P@V)@Wo == P@(V@Wo)), block-diagonal conv weight over the tile.
    wqkv = jnp.concatenate(
        [params["wq"], params["wk"], params["wv"] @ params["wo"]], axis=1)   # (D, 3D)
    bqkv = jnp.concatenate(
        [params["bq"], params["bk"], params["bv"] @ params["wo"]], axis=1)   # (1, 3D)
    w_big = _build_conv_weight(params["conv_mean_w"], params["conv_std_w"], Bt, cout_p)
    to1 = params["trade_off1"].reshape(1, D)
    to2 = params["trade_off2"].reshape(1, D)

    kern = functools.partial(_fused_kernel, W=W, seq_num=seq_num, lp_num=lp_num,
                             label_num=label_num, pred_num=pred_num, cout_p=cout_p)

    batch3 = lambda b: (b, 0, 0)
    const2 = lambda b: (0, 0)

    out_shape = (
        jax.ShapeDtypeStruct((B, L_seq, D), seq.dtype),        # seq_out
        jax.ShapeDtypeStruct((B, L_lp, D), label_pred.dtype),  # label_pred_out
        jax.ShapeDtypeStruct((B, L_lp, D), seq.dtype),         # label_pred_mean (expanded)
        jax.ShapeDtypeStruct((B, L_lp, D), seq.dtype),         # label_pred_std (expanded)
        jax.ShapeDtypeStruct((B, pred_num, D), seq.dtype),     # pred_mean
        jax.ShapeDtypeStruct((B, pred_num, D), seq.dtype),     # pred_std
    )
    in_specs = [
        pl.BlockSpec((Bt, L_seq, D), batch3),
        pl.BlockSpec((Bt, L_lp, D), batch3),
        pl.BlockSpec((D, 3 * D), const2),
        pl.BlockSpec((1, 3 * D), const2),
        pl.BlockSpec((1, D), const2),
        pl.BlockSpec((2 * Bt * cout_p, 6 * Bt * seq_num), const2),
        pl.BlockSpec((1, D), const2),
        pl.BlockSpec((1, D), const2),
    ]
    out_specs = (
        pl.BlockSpec((Bt, L_seq, D), batch3),
        pl.BlockSpec((Bt, L_lp, D), batch3),
        pl.BlockSpec((Bt, L_lp, D), batch3),
        pl.BlockSpec((Bt, L_lp, D), batch3),
        pl.BlockSpec((Bt, pred_num, D), batch3),
        pl.BlockSpec((Bt, pred_num, D), batch3),
    )
    return pl.pallas_call(
        kern,
        out_shape=out_shape,
        grid=(B // Bt,),
        in_specs=in_specs,
        out_specs=out_specs,
        compiler_params=pltpu.CompilerParams(
            dimension_semantics=("parallel",),
            vmem_limit_bytes=32 * 1024 * 1024),
    )(seq, label_pred, wqkv, bqkv, params["bo"], w_big, to1, to2)


# ----------------------------------------------------------------------------
# Pure-JAX reference for the correctness check
# ----------------------------------------------------------------------------
def reference_forward(seq, label_pred, params, *, window_size, label_num):
    W = window_size

    def win_norm(x):
        B, L, D = x.shape
        n = L // W
        xw = x.reshape(B, n, W, D)
        mean = xw.mean(axis=2)
        var = ((xw - mean[:, :, None, :]) ** 2).mean(axis=2)
        std = jnp.sqrt(var + 1e-5)
        out = ((xw - mean[:, :, None, :]) / std[:, :, None, :]).reshape(B, L, D)
        return out, mean, std

    def attn(x):
        d = x.shape[-1]
        q = x @ params["wq"] + params["bq"]
        k = x @ params["wk"] + params["bk"]
        v = x @ params["wv"] + params["bv"]
        s = jnp.einsum("bld,bsd->bls", q, k) / math.sqrt(d)
        p = jax.nn.softmax(s, axis=-1)
        return jnp.einsum("bls,bsd->bld", p, v) @ params["wo"] + params["bo"]

    def elu(x):
        return jnp.where(x > 0, x, jnp.exp(jnp.minimum(x, 0.0)) - 1.0)

    def conv(x, w):
        xp = jnp.pad(elu(x), ((0, 0), (0, 0), (1, 1)))
        return (jnp.einsum("oc,bcd->bod", w[:, :, 0], xp[:, :, :-2])
                + jnp.einsum("oc,bcd->bod", w[:, :, 1], xp[:, :, 1:-1])
                + jnp.einsum("oc,bcd->bod", w[:, :, 2], xp[:, :, 2:]))

    B, L, D = seq.shape
    seq_out, sm, ss = win_norm(seq)
    lp_out, lpm, lps = win_norm(label_pred)
    pm = conv(attn(sm), params["conv_mean_w"])
    ps = conv(attn(ss), params["conv_std_w"])
    m_full = jnp.concatenate([lpm[:, :label_num, :], pm], axis=1)
    s_full = jnp.concatenate([lps[:, :label_num, :], ps], axis=1)
    m_exp = (params["trade_off1"][:, :, None, :]
             * jnp.repeat(m_full[:, :, None, :], W, axis=2)).reshape(B, -1, D)
    s_exp = (params["trade_off2"][:, :, None, :]
             * jnp.repeat(s_full[:, :, None, :], W, axis=2)).reshape(B, -1, D)
    return seq_out, lp_out, m_exp, s_exp, pm, ps


# ----------------------------------------------------------------------------
if __name__ == "__main__":
    batch = 2
    window_size = 8
    seq_len = 32      # seq_num = 4
    label_len = 8     # label_num = 1
    pred_len = 16     # pred_num = 2
    D = 32            # feature_dim

    seq_num = seq_len // window_size
    label_num = label_len // window_size
    pred_num = pred_len // window_size

    key = jax.random.PRNGKey(0)
    keys = jax.random.split(key, 12)

    seq = jax.random.normal(keys[0], (batch, seq_len, D), jnp.float32)
    label_pred = jax.random.normal(keys[1], (batch, label_len + pred_len, D), jnp.float32)

    params = {
        # AttentionLayer projections (feature_dim -> feature_dim), n_heads=1
        # NOTE: stored as x @ W (already transposed vs. PyTorch nn.Linear).
        "wq": 0.1 * jax.random.normal(keys[2], (D, D), jnp.float32),
        "wk": 0.1 * jax.random.normal(keys[3], (D, D), jnp.float32),
        "wv": 0.1 * jax.random.normal(keys[4], (D, D), jnp.float32),
        "wo": 0.1 * jax.random.normal(keys[5], (D, D), jnp.float32),
        "bq": 0.1 * jax.random.normal(keys[6], (1, D), jnp.float32),
        "bk": 0.1 * jax.random.normal(keys[7], (1, D), jnp.float32),
        "bv": 0.1 * jax.random.normal(keys[8], (1, D), jnp.float32),
        "bo": 0.1 * jax.random.normal(keys[9], (1, D), jnp.float32),
        # Conv1d(seq_num -> pred_num, k=3, padding=1, bias=False)
        "conv_mean_w": 0.1 * jax.random.normal(keys[10], (pred_num, seq_num, 3), jnp.float32),
        "conv_std_w": 0.1 * jax.random.normal(keys[11], (pred_num, seq_num, 3), jnp.float32),
        # trade-off parameters (as in __init__)
        "trade_off1": jnp.ones((1, 1, D), jnp.float32),
        "trade_off2": jnp.zeros((1, 1, D), jnp.float32),
    }

    fwd = jax.jit(functools.partial(distribution_block_forward,
                                    window_size=window_size, label_num=label_num))
    outs = fwd(seq, label_pred, params)
    outs = jax.block_until_ready(outs)

    refs = reference_forward(seq, label_pred, params,
                             window_size=window_size, label_num=label_num)
    for o, r in zip(outs, refs):
        assert o.shape == r.shape, (o.shape, r.shape)
        assert jnp.allclose(o, r, rtol=1e-3, atol=1e-3), float(jnp.max(jnp.abs(o - r)))

    print("KERNEL_OK")
</pallas_src>

<mosaic_0001>
module attributes {stable_mosaic.version = 11 : i64} {
  func.func @_fused_kernel(%arg0: i32, %arg1: memref<1x32x32xf32, #tpu.memory_space<vmem>>, %arg2: memref<1x24x32xf32, #tpu.memory_space<vmem>>, %arg3: memref<32x96xf32, #tpu.memory_space<vmem>>, %arg4: memref<1x96xf32, #tpu.memory_space<vmem>>, %arg5: memref<1x32xf32, #tpu.memory_space<vmem>>, %arg6: memref<16x24xf32, #tpu.memory_space<vmem>>, %arg7: memref<1x32xf32, #tpu.memory_space<vmem>>, %arg8: memref<1x32xf32, #tpu.memory_space<vmem>>, %arg9: memref<1x32x32xf32, #tpu.memory_space<vmem>>, %arg10: memref<1x24x32xf32, #tpu.memory_space<vmem>>, %arg11: memref<1x24x32xf32, #tpu.memory_space<vmem>>, %arg12: memref<1x24x32xf32, #tpu.memory_space<vmem>>, %arg13: memref<1x2x32xf32, #tpu.memory_space<vmem>>, %arg14: memref<1x2x32xf32, #tpu.memory_space<vmem>>) attributes {dimension_semantics = [#tpu.dimension_semantics<parallel>], iteration_bounds = array<i64: 2>, scalar_prefetch = 0 : i64, scratch_operands = 0 : i64, tpu.core_type = #tpu.core_type<tc>, window_params = [{transform_indices = @transform_0, window_bounds = array<i64: 1, 32, 32>}, {transform_indices = @transform_1, window_bounds = array<i64: 1, 24, 32>}, {pipeline_mode = #tpu.pipeline_mode<synchronous>, transform_indices = @transform_2, window_bounds = array<i64: 32, 96>}, {pipeline_mode = #tpu.pipeline_mode<synchronous>, transform_indices = @transform_3, window_bounds = array<i64: 1, 96>}, {pipeline_mode = #tpu.pipeline_mode<synchronous>, transform_indices = @transform_4, window_bounds = array<i64: 1, 32>}, {pipeline_mode = #tpu.pipeline_mode<synchronous>, transform_indices = @transform_5, window_bounds = array<i64: 16, 24>}, {pipeline_mode = #tpu.pipeline_mode<synchronous>, transform_indices = @transform_6, window_bounds = array<i64: 1, 32>}, {pipeline_mode = #tpu.pipeline_mode<synchronous>, transform_indices = @transform_7, window_bounds = array<i64: 1, 32>}, {transform_indices = @transform_8, window_bounds = array<i64: 1, 32, 32>}, {transform_indices = @transform_9, window_bounds = array<i64: 1, 24, 32>}, {transform_indices = @transform_10, window_bounds = array<i64: 1, 24, 32>}, {transform_indices = @transform_11, window_bounds = array<i64: 1, 24, 32>}, {transform_indices = @transform_12, window_bounds = array<i64: 1, 2, 32>}, {transform_indices = @transform_13, window_bounds = array<i64: 1, 2, 32>}]} {
    %c0 = arith.constant 0 : index
    %c0_0 = arith.constant 0 : index
    %c0_1 = arith.constant 0 : index
    %0 = vector.load %arg1[%c0, %c0_0, %c0_1] : memref<1x32x32xf32, #tpu.memory_space<vmem>>, vector<1x32x32xf32>
    %1 = vector.shape_cast %0 : vector<1x32x32xf32> to vector<4x8x32xf32>
    %cst = arith.constant dense<0.000000e+00> : vector<4x32xf32>
    %2 = vector.multi_reduction <add>, %1, %cst [1] : vector<4x8x32xf32> to vector<4x32xf32>
    %3 = vector.shape_cast %2 : vector<4x32xf32> to vector<4x1x32xf32>
    %cst_2 = arith.constant 8.000000e+00 : f32
    %4 = vector.broadcast %cst_2 : f32 to vector<4x1x32xf32>
    %5 = arith.divf %3, %4 : vector<4x1x32xf32>
    %6 = arith.mulf %1, %1 : vector<4x8x32xf32>
    %cst_3 = arith.constant dense<0.000000e+00> : vector<4x32xf32>
    %7 = vector.multi_reduction <add>, %6, %cst_3 [1] : vector<4x8x32xf32> to vector<4x32xf32>
    %8 = vector.shape_cast %7 : vector<4x32xf32> to vector<4x1x32xf32>
    %cst_4 = arith.constant 8.000000e+00 : f32
    %9 = vector.broadcast %cst_4 : f32 to vector<4x1x32xf32>
    %10 = arith.divf %8, %9 : vector<4x1x32xf32>
    %11 = arith.mulf %5, %5 : vector<4x1x32xf32>
    %12 = arith.subf %10, %11 : vector<4x1x32xf32>
    %cst_5 = arith.constant 9.99999974E-6 : f32
    %13 = vector.broadcast %cst_5 : f32 to vector<4x1x32xf32>
    %14 = arith.addf %12, %13 : vector<4x1x32xf32>
    %15 = math.rsqrt %14 : vector<4x1x32xf32>
    %16 = vector.broadcast %5 : vector<4x1x32xf32> to vector<4x8x32xf32>
    %17 = arith.subf %1, %16 : vector<4x8x32xf32>
    %18 = vector.broadcast %15 : vector<4x1x32xf32> to vector<4x8x32xf32>
    %19 = arith.mulf %17, %18 : vector<4x8x32xf32>
    %20 = vector.shape_cast %19 : vector<4x8x32xf32> to vector<1x32x32xf32>
    %c0_6 = arith.constant 0 : index
    %c0_7 = arith.constant 0 : index
    %c0_8 = arith.constant 0 : index
    %21 = vector.load %arg9[%c0_6, %c0_7, %c0_8] : memref<1x32x32xf32, #tpu.memory_space<vmem>>, vector<1x32x32xf32>
    tpu.vector_store %arg9[%c0_6, %c0_7, %c0_8], %20 {strides = array<i32>} : memref<1x32x32xf32, #tpu.memory_space<vmem>>, vector<1x32x32xf32>,
    %cst_9 = arith.constant 9.99999974E-6 : f32
    %22 = vector.broadcast %cst_9 : f32 to vector<4x1x32xf32>
    %23 = arith.addf %12, %22 : vector<4x1x32xf32>
    %24 = math.sqrt %23 : vector<4x1x32xf32>
    %25 = vector.shape_cast %5 : vector<4x1x32xf32> to vector<4x32xf32>
    %26 = vector.shape_cast %24 : vector<4x1x32xf32> to vector<4x32xf32>
    %c0_10 = arith.constant 0 : index
    %c0_11 = arith.constant 0 : index
    %c0_12 = arith.constant 0 : index
    %27 = vector.load %arg2[%c0_10, %c0_11, %c0_12] : memref<1x24x32xf32, #tpu.memory_space<vmem>>, vector<1x24x32xf32>
    %28 = vector.shape_cast %27 : vector<1x24x32xf32> to vector<3x8x32xf32>
    %cst_13 = arith.constant dense<0.000000e+00> : vector<3x32xf32>
    %29 = vector.multi_reduction <add>, %28, %cst_13 [1] : vector<3x8x32xf32> to vector<3x32xf32>
    %30 = vector.shape_cast %29 : vector<3x32xf32> to vector<3x1x32xf32>
    %cst_14 = arith.constant 8.000000e+00 : f32
    %31 = vector.broadcast %cst_14 : f32 to vector<3x1x32xf32>
    %32 = arith.divf %30, %31 : vector<3x1x32xf32>
    %33 = arith.mulf %28, %28 : vector<3x8x32xf32>
    %cst_15 = arith.constant dense<0.000000e+00> : vector<3x32xf32>
    %34 = vector.multi_reduction <add>, %33, %cst_15 [1] : vector<3x8x32xf32> to vector<3x32xf32>
    %35 = vector.shape_cast %34 : vector<3x32xf32> to vector<3x1x32xf32>
    %cst_16 = arith.constant 8.000000e+00 : f32
    %36 = vector.broadcast %cst_16 : f32 to vector<3x1x32xf32>
    %37 = arith.divf %35, %36 : vector<3x1x32xf32>
    %38 = arith.mulf %32, %32 : vector<3x1x32xf32>
    %39 = arith.subf %37, %38 : vector<3x1x32xf32>
    %cst_17 = arith.constant 9.99999974E-6 : f32
    %40 = vector.broadcast %cst_17 : f32 to vector<3x1x32xf32>
    %41 = arith.addf %39, %40 : vector<3x1x32xf32>
    %42 = math.rsqrt %41 : vector<3x1x32xf32>
    %43 = vector.broadcast %32 : vector<3x1x32xf32> to vector<3x8x32xf32>
    %44 = arith.subf %28, %43 : vector<3x8x32xf32>
    %45 = vector.broadcast %42 : vector<3x1x32xf32> to vector<3x8x32xf32>
    %46 = arith.mulf %44, %45 : vector<3x8x32xf32>
    %47 = vector.shape_cast %46 : vector<3x8x32xf32> to vector<1x24x32xf32>
    %c0_18 = arith.constant 0 : index
    %c0_19 = arith.constant 0 : index
    %c0_20 = arith.constant 0 : index
    %48 = vector.load %arg10[%c0_18, %c0_19, %c0_20] : memref<1x24x32xf32, #tpu.memory_space<vmem>>, vector<1x24x32xf32>
    tpu.vector_store %arg10[%c0_18, %c0_19, %c0_20], %47 {strides = array<i32>} : memref<1x24x32xf32, #tpu.memory_space<vmem>>, vector<1x24x32xf32>,
    %cst_21 = arith.constant 9.99999974E-6 : f32
    %49 = vector.broadcast %cst_21 : f32 to vector<3x1x32xf32>
    %50 = arith.addf %39, %49 : vector<3x1x32xf32>
    %51 = math.sqrt %50 : vector<3x1x32xf32>
    %52 = vector.shape_cast %32 : vector<3x1x32xf32> to vector<3x32xf32>
    %53 = vector.shape_cast %51 : vector<3x1x32xf32> to vector<3x32xf32>
    %c0_22 = arith.constant 0 : index
    %c0_23 = arith.constant 0 : index
    %54 = vector.load %arg7[%c0_22, %c0_23] : memref<1x32xf32, #tpu.memory_space<vmem>>, vector<1x32xf32>
    %c0_24 = arith.constant 0 : index
    %c0_25 = arith.constant 0 : index
    %55 = vector.load %arg8[%c0_24, %c0_25] : memref<1x32xf32, #tpu.memory_space<vmem>>, vector<1x32xf32>
    %56 = vector.broadcast %54 : vector<1x32xf32> to vector<3x32xf32>
    %57 = arith.mulf %56, %52 : vector<3x32xf32>
    %58 = vector.shape_cast %57 : vector<3x32xf32> to vector<3x1x32xf32>
    %59 = vector.shape_cast %58 : vector<3x1x32xf32> to vector<3x1x32xf32>
    %60 = vector.broadcast %59 : vector<3x1x32xf32> to vector<3x8x32xf32>
    %61 = vector.broadcast %55 : vector<1x32xf32> to vector<3x32xf32>
    %62 = arith.mulf %61, %53 : vector<3x32xf32>
    %63 = vector.shape_cast %62 : vector<3x32xf32> to vector<3x1x32xf32>
    %64 = vector.shape_cast %63 : vector<3x1x32xf32> to vector<3x1x32xf32>
    %65 = vector.broadcast %64 : vector<3x1x32xf32> to vector<3x8x32xf32>
    %66 = vector.shape_cast %60 : vector<3x8x32xf32> to vector<1x24x32xf32>
    %67 = vector.extract_strided_slice %66 {offsets = [0, 0, 0], sizes = [1, 8, 32], strides = [1, 1, 1]} : vector<1x24x32xf32> to vector<1x8x32xf32>
    %c0_26 = arith.constant 0 : index
    %c0_27 = arith.constant 0 : index
    %c0_28 = arith.constant 0 : index
    %68 = vector.load %arg11[%c0_26, %c0_27, %c0_28] : memref<1x24x32xf32, #tpu.memory_space<vmem>>, vector<1x8x32xf32>
    tpu.vector_store %arg11[%c0_26, %c0_27, %c0_28], %67 {strides = array<i32>} : memref<1x24x32xf32, #tpu.memory_space<vmem>>, vector<1x8x32xf32>,
    %69 = vector.shape_cast %65 : vector<3x8x32xf32> to vector<1x24x32xf32>
    %70 = vector.extract_strided_slice %69 {offsets = [0, 0, 0], sizes = [1, 8, 32], strides = [1, 1, 1]} : vector<1x24x32xf32> to vector<1x8x32xf32>
    %c0_29 = arith.constant 0 : index
    %c0_30 = arith.constant 0 : index
    %c0_31 = arith.constant 0 : index
    %71 = vector.load %arg12[%c0_29, %c0_30, %c0_31] : memref<1x24x32xf32, #tpu.memory_space<vmem>>, vector<1x8x32xf32>
    tpu.vector_store %arg12[%c0_29, %c0_30, %c0_31], %70 {strides = array<i32>} : memref<1x24x32xf32, #tpu.memory_space<vmem>>, vector<1x8x32xf32>,
    %72 = tpu.concatenate %25, %26 in 0 : vector<4x32xf32>, vector<4x32xf32> -> vector<8x32xf32>
    %c0_32 = arith.constant 0 : index
    %c0_33 = arith.constant 0 : index
    %73 = vector.load %arg3[%c0_32, %c0_33] : memref<32x96xf32, #tpu.memory_space<vmem>>, vector<32x96xf32>
    %cst_34 = arith.constant dense<0.000000e+00> : vector<8x96xf32>
    %74 = tpu.matmul %72, %73, %cst_34 {dimension_numbers = #tpu.dot_dimension_numbers<[1], [0], [0], [1], [0, 0, 1, 1], [], []>} : vector<8x32xf32>, vector<32x96xf32>, vector<8x96xf32> -> vector<8x96xf32>
    %c0_35 = arith.constant 0 : index
    %c0_36 = arith.constant 0 : index
    %75 = vector.load %arg4[%c0_35, %c0_36] : memref<1x96xf32, #tpu.memory_space<vmem>>, vector<1x96xf32>
    %76 = vector.broadcast %75 : vector<1x96xf32> to vector<8x96xf32>
    %77 = arith.addf %74, %76 : vector<8x96xf32>
    %78 = vector.extract_strided_slice %77 {offsets = [0, 0], sizes = [8, 32], strides = [1, 1]} : vector<8x96xf32> to vector<8x32xf32>
    %79 = vector.extract_strided_slice %77 {offsets = [0, 32], sizes = [8, 32], strides = [1, 1]} : vector<8x96xf32> to vector<8x32xf32>
    %80 = vector.extract_strided_slice %77 {offsets = [0, 64], sizes = [8, 32], strides = [1, 1]} : vector<8x96xf32> to vector<8x32xf32>
    %cst_37 = arith.constant dense<0.000000e+00> : vector<8x8xf32>
    %81 = tpu.matmul %78, %79, %cst_37 {dimension_numbers = #tpu.dot_dimension_numbers<[1], [1], [0], [0], [0, 0, 1, 0], [], []>} : vector<8x32xf32>, vector<8x32xf32>, vector<8x8xf32> -> vector<8x8xf32>
    %cst_38 = arith.constant 0.176776692 : f32
    %82 = vector.broadcast %cst_38 : f32 to vector<8x8xf32>
    %83 = arith.mulf %81, %82 : vector<8x8xf32>
    %84 = tpu.iota {dimensions = array<i32: 0>} : vector<8x1xi32>
    %85 = arith.sitofp %84 : vector<8x1xi32> to vector<8x1xf32>
    %cst_39 = arith.constant 4.000000e+00 : f32
    %86 = vector.broadcast %cst_39 : f32 to vector<8x1xf32>
    %87 = arith.divf %85, %86 : vector<8x1xf32>
    %88 = math.floor %87 : vector<8x1xf32>
    %89 = tpu.iota {dimensions = array<i32: 1>} : vector<1x8xi32>
    %90 = arith.sitofp %89 : vector<1x8xi32> to vector<1x8xf32>
    %cst_40 = arith.constant 4.000000e+00 : f32
    %91 = vector.broadcast %cst_40 : f32 to vector<1x8xf32>
    %92 = arith.divf %90, %91 : vector<1x8xf32>
    %93 = math.floor %92 : vector<1x8xf32>
    %94 = vector.broadcast %88 : vector<8x1xf32> to vector<8x8xf32>
    %95 = vector.broadcast %93 : vector<1x8xf32> to vector<8x8xf32>
    %96 = arith.cmpf oeq, %94, %95 : vector<8x8xf32>
    %cst_41 = arith.constant -1.000000e+30 : f32
    %97 = vector.broadcast %cst_41 : f32 to vector<8x8xf32>
    %98 = arith.select %96, %83, %97 : vector<8x8xi1>, vector<8x8xf32>
    %cst_42 = arith.constant dense<0xFF800000> : vector<8xf32>
    %99 = vector.multi_reduction <maximumf>, %98, %cst_42 [1] : vector<8x8xf32> to vector<8xf32>
    %100 = vector.shape_cast %99 : vector<8xf32> to vector<8x1xf32>
    %101 = vector.broadcast %100 : vector<8x1xf32> to vector<8x8xf32>
    %102 = arith.subf %98, %101 : vector<8x8xf32>
    %103 = math.exp %102 : vector<8x8xf32>
    %cst_43 = arith.constant dense<0.000000e+00> : vector<8xf32>
    %104 = vector.multi_reduction <add>, %103, %cst_43 [1] : vector<8x8xf32> to vector<8xf32>
    %105 = vector.shape_cast %104 : vector<8xf32> to vector<8x1xf32>
    %cst_44 = arith.constant dense<0.000000e+00> : vector<8x32xf32>
    %106 = tpu.matmul %103, %80, %cst_44 {dimension_numbers = #tpu.dot_dimension_numbers<[1], [0], [0], [1], [0, 0, 1, 1], [], []>} : vector<8x8xf32>, vector<8x32xf32>, vector<8x32xf32> -> vector<8x32xf32>
    %107 = tpu.reciprocal %105 : vector<8x1xf32> -> vector<8x1xf32>
    %108 = vector.broadcast %107 : vector<8x1xf32> to vector<8x32xf32>
    %109 = arith.mulf %106, %108 : vector<8x32xf32>
    %c0_45 = arith.constant 0 : index
    %c0_46 = arith.constant 0 : index
    %110 = vector.load %arg5[%c0_45, %c0_46] : memref<1x32xf32, #tpu.memory_space<vmem>>, vector<1x32xf32>
    %111 = vector.broadcast %110 : vector<1x32xf32> to vector<8x32xf32>
    %112 = arith.addf %109, %111 : vector<8x32xf32>
    %cst_47 = arith.constant 0.000000e+00 : f32
    %113 = vector.broadcast %cst_47 : f32 to vector<8x32xf32>
    %114 = arith.cmpf ogt, %112, %113 : vector<8x32xf32>
    %cst_48 = arith.constant 0.000000e+00 : f32
    %115 = vector.broadcast %cst_48 : f32 to vector<8x32xf32>
    %116 = arith.minimumf %112, %115 : vector<8x32xf32>
    %117 = math.exp %116 : vector<8x32xf32>
    %cst_49 = arith.constant 1.000000e+00 : f32
    %118 = vector.broadcast %cst_49 : f32 to vector<8x32xf32>
    %119 = arith.subf %117, %118 : vector<8x32xf32>
    %120 = arith.select %114, %112, %119 : vector<8x32xi1>, vector<8x32xf32>
    %121 = tpu.iota {dimensions = array<i32: 1>} : vector<8x32xi32>
    %c0_i32 = arith.constant 0 : i32
    %122 = vector.broadcast %c0_i32 : i32 to vector<8x32xi32>
    %123 = arith.cmpi eq, %121, %122 : vector<8x32xi32>
    %c1_i32 = arith.constant 1 : i32
    %124 = tpu.dynamic_rotate %120 by %c1_i32 dim 1 : vector<8x32xf32>, i32 -> vector<8x32xf32>
    %cst_50 = arith.constant 0.000000e+00 : f32
    %125 = vector.broadcast %cst_50 : f32 to vector<8x32xf32>
    %126 = arith.select %123, %125, %124 : vector<8x32xi1>, vector<8x32xf32>
    %c31_i32 = arith.constant 31 : i32
    %127 = vector.broadcast %c31_i32 : i32 to vector<8x32xi32>
    %128 = arith.cmpi eq, %121, %127 : vector<8x32xi32>
    %c31_i32_51 = arith.constant 31 : i32
    %129 = tpu.dynamic_rotate %120 by %c31_i32_51 dim 1 : vector<8x32xf32>, i32 -> vector<8x32xf32>
    %cst_52 = arith.constant 0.000000e+00 : f32
    %130 = vector.broadcast %cst_52 : f32 to vector<8x32xf32>
    %131 = arith.select %128, %130, %129 : vector<8x32xi1>, vector<8x32xf32>
    %132 = tpu.concatenate %126, %120, %131 in 0 : vector<8x32xf32>, vector<8x32xf32>, vector<8x32xf32> -> vector<24x32xf32>
    %c0_53 = arith.constant 0 : index
    %c0_54 = arith.constant 0 : index
    %133 = vector.load %arg6[%c0_53, %c0_54] : memref<16x24xf32, #tpu.memory_space<vmem>>, vector<16x24xf32>
    %cst_55 = arith.constant dense<0.000000e+00> : vector<16x32xf32>
    %134 = tpu.matmul %133, %132, %cst_55 {dimension_numbers = #tpu.dot_dimension_numbers<[1], [0], [0], [1], [0, 0, 1, 1], [], []>} : vector<16x24xf32>, vector<24x32xf32>, vector<16x32xf32> -> vector<16x32xf32>
    %135 = vector.extract_strided_slice %134 {offsets = [0, 0], sizes = [8, 32], strides = [1, 1]} : vector<16x32xf32> to vector<8x32xf32>
    %136 = vector.extract_strided_slice %134 {offsets = [8, 0], sizes = [8, 32], strides = [1, 1]} : vector<16x32xf32> to vector<8x32xf32>
    %137 = vector.shape_cast %135 : vector<8x32xf32> to vector<1x8x32xf32>
    %138 = vector.extract_strided_slice %137 {offsets = [0, 0, 0], sizes = [1, 2, 32], strides = [1, 1, 1]} : vector<1x8x32xf32> to vector<1x2x32xf32>
    %c0_56 = arith.constant 0 : index
    %c0_57 = arith.constant 0 : index
    %c0_58 = arith.constant 0 : index
    %139 = vector.load %arg13[%c0_56, %c0_57, %c0_58] : memref<1x2x32xf32, #tpu.memory_space<vmem>>, vector<1x2x32xf32>
    tpu.vector_store %arg13[%c0_56, %c0_57, %c0_58], %138 {strides = array<i32>} : memref<1x2x32xf32, #tpu.memory_space<vmem>>, vector<1x2x32xf32>,
    %140 = vector.shape_cast %136 : vector<8x32xf32> to vector<1x8x32xf32>
    %141 = vector.extract_strided_slice %140 {offsets = [0, 0, 0], sizes = [1, 2, 32], strides = [1, 1, 1]} : vector<1x8x32xf32> to vector<1x2x32xf32>
    %c0_59 = arith.constant 0 : index
    %c0_60 = arith.constant 0 : index
    %c0_61 = arith.constant 0 : index
    %142 = vector.load %arg14[%c0_59, %c0_60, %c0_61] : memref<1x2x32xf32, #tpu.memory_space<vmem>>, vector<1x2x32xf32>
    tpu.vector_store %arg14[%c0_59, %c0_60, %c0_61], %141 {strides = array<i32>} : memref<1x2x32xf32, #tpu.memory_space<vmem>>, vector<1x2x32xf32>,
    %143 = vector.broadcast %54 : vector<1x32xf32> to vector<8x32xf32>
    %144 = arith.mulf %143, %135 : vector<8x32xf32>
    %145 = vector.shape_cast %144 : vector<8x32xf32> to vector<8x1x32xf32>
    %146 = vector.shape_cast %145 : vector<8x1x32xf32> to vector<8x1x32xf32>
    %147 = vector.broadcast %146 : vector<8x1x32xf32> to vector<8x8x32xf32>
    %148 = vector.broadcast %55 : vector<1x32xf32> to vector<8x32xf32>
    %149 = arith.mulf %148, %136 : vector<8x32xf32>
    %150 = vector.shape_cast %149 : vector<8x32xf32> to vector<8x1x32xf32>
    %151 = vector.shape_cast %150 : vector<8x1x32xf32> to vector<8x1x32xf32>
    %152 = vector.broadcast %151 : vector<8x1x32xf32> to vector<8x8x32xf32>
    %153 = vector.shape_cast %147 : vector<8x8x32xf32> to vector<1x64x32xf32>
    %154 = vector.extract_strided_slice %153 {offsets = [0, 0, 0], sizes = [1, 16, 32], strides = [1, 1, 1]} : vector<1x64x32xf32> to vector<1x16x32xf32>
    %c0_62 = arith.constant 0 : index
    %c8 = arith.constant 8 : index
    %c0_63 = arith.constant 0 : index
    %155 = vector.load %arg11[%c0_62, %c8, %c0_63] : memref<1x24x32xf32, #tpu.memory_space<vmem>>, vector<1x16x32xf32>
    tpu.vector_store %arg11[%c0_62, %c8, %c0_63], %154 {strides = array<i32>} : memref<1x24x32xf32, #tpu.memory_space<vmem>>, vector<1x16x32xf32>,
    %156 = vector.shape_cast %152 : vector<8x8x32xf32> to vector<1x64x32xf32>
    %157 = vector.extract_strided_slice %156 {offsets = [0, 0, 0], sizes = [1, 16, 32], strides = [1, 1, 1]} : vector<1x64x32xf32> to vector<1x16x32xf32>
    %c0_64 = arith.constant 0 : index
    %c8_65 = arith.constant 8 : index
    %c0_66 = arith.constant 0 : index
    %158 = vector.load %arg12[%c0_64, %c8_65, %c0_66] : memref<1x24x32xf32, #tpu.memory_space<vmem>>, vector<1x16x32xf32>
    tpu.vector_store %arg12[%c0_64, %c8_65, %c0_66], %157 {strides = array<i32>} : memref<1x24x32xf32, #tpu.memory_space<vmem>>, vector<1x16x32xf32>,
    return
  }
  func.func @transform_0(%arg0: i32) -> (i32, i32, i32) {
    %c0_i32 = arith.constant 0 : i32
    %c0_i32_0 = arith.constant 0 : i32
    %c0_i32_1 = arith.constant 0 : i32
    return %arg0, %c0_i32, %c0_i32_0 : i32, i32, i32
  }
  func.func @transform_1(%arg0: i32) -> (i32, i32, i32) {
    %c0_i32 = arith.constant 0 : i32
    %c0_i32_0 = arith.constant 0 : i32
    %c0_i32_1 = arith.constant 0 : i32
    return %arg0, %c0_i32, %c0_i32_0 : i32, i32, i32
  }
  func.func @transform_2(%arg0: i32) -> (i32, i32) {
    %c0_i32 = arith.constant 0 : i32
    %c0_i32_0 = arith.constant 0 : i32
    %c0_i32_1 = arith.constant 0 : i32
    return %c0_i32, %c0_i32_0 : i32, i32
  }
  func.func @transform_3(%arg0: i32) -> (i32, i32) {
    %c0_i32 = arith.constant 0 : i32
    %c0_i32_0 = arith.constant 0 : i32
    %c0_i32_1 = arith.constant 0 : i32
    return %c0_i32, %c0_i32_0 : i32, i32
  }
  func.func @transform_4(%arg0: i32) -> (i32, i32) {
    %c0_i32 = arith.constant 0 : i32
    %c0_i32_0 = arith.constant 0 : i32
    %c0_i32_1 = arith.constant 0 : i32
    return %c0_i32, %c0_i32_0 : i32, i32
  }
  func.func @transform_5(%arg0: i32) -> (i32, i32) {
    %c0_i32 = arith.constant 0 : i32
    %c0_i32_0 = arith.constant 0 : i32
    %c0_i32_1 = arith.constant 0 : i32
    return %c0_i32, %c0_i32_0 : i32, i32
  }
  func.func @transform_6(%arg0: i32) -> (i32, i32) {
    %c0_i32 = arith.constant 0 : i32
    %c0_i32_0 = arith.constant 0 : i32
    %c0_i32_1 = arith.constant 0 : i32
    return %c0_i32, %c0_i32_0 : i32, i32
  }
  func.func @transform_7(%arg0: i32) -> (i32, i32) {
    %c0_i32 = arith.constant 0 : i32
    %c0_i32_0 = arith.constant 0 : i32
    %c0_i32_1 = arith.constant 0 : i32
    return %c0_i32, %c0_i32_0 : i32, i32
  }
  func.func @transform_8(%arg0: i32) -> (i32, i32, i32) {
    %c0_i32 = arith.constant 0 : i32
    %c0_i32_0 = arith.constant 0 : i32
    %c0_i32_1 = arith.constant 0 : i32
    return %arg0, %c0_i32, %c0_i32_0 : i32, i32, i32
  }
  func.func @transform_9(%arg0: i32) -> (i32, i32, i32) {
    %c0_i32 = arith.constant 0 : i32
    %c0_i32_0 = arith.constant 0 : i32
    %c0_i32_1 = arith.constant 0 : i32
    return %arg0, %c0_i32, %c0_i32_0 : i32, i32, i32
  }
  func.func @transform_10(%arg0: i32) -> (i32, i32, i32) {
    %c0_i32 = arith.constant 0 : i32
    %c0_i32_0 = arith.constant 0 : i32
    %c0_i32_1 = arith.constant 0 : i32
    return %arg0, %c0_i32, %c0_i32_0 : i32, i32, i32
  }
  func.func @transform_11(%arg0: i32) -> (i32, i32, i32) {
    %c0_i32 = arith.constant 0 : i32
    %c0_i32_0 = arith.constant 0 : i32
    %c0_i32_1 = arith.constant 0 : i32
    return %arg0, %c0_i32, %c0_i32_0 : i32, i32, i32
  }
  func.func @transform_12(%arg0: i32) -> (i32, i32, i32) {
    %c0_i32 = arith.constant 0 : i32
    %c0_i32_0 = arith.constant 0 : i32
    %c0_i32_1 = arith.constant 0 : i32
    return %arg0, %c0_i32, %c0_i32_0 : i32, i32, i32
  }
  func.func @transform_13(%arg0: i32) -> (i32, i32, i32) {
    %c0_i32 = arith.constant 0 : i32
    %c0_i32_0 = arith.constant 0 : i32
    %c0_i32_1 = arith.constant 0 : i32
    return %arg0, %c0_i32, %c0_i32_0 : i32, i32, i32
  }
}

</mosaic_0001>

<llo_original>
// kernel: distribution_block_forward.1
$region0: #{distribution_block_forward.1}
  #allocation0 [shape = 'u32[]', space=smem, size = 0x4, offset = 0x4, fixed_abs, tag = 'smem constant byte address 0x4 - core index']
  #allocation1 [shape = 'u32[144,128]{1,0:T(1,128)}', space=vmem, size = 0x12000, scoped, tag = 'internal scratch']
  %s0 = inlined_call_operand.vmem [shape: f32[2,32,32], index: 0, kind: input, shape index: {}]
  %s1 = inlined_call_operand.vmem [shape: f32[2,24,32], index: 1, kind: input, shape index: {}]
  %s2 = inlined_call_operand.vmem [shape: f32[32,96], index: 2, kind: input, shape index: {}]
  %s3 = inlined_call_operand.vmem [shape: f32[1,96], index: 3, kind: input, shape index: {}]
  %s4 = inlined_call_operand.vmem [shape: f32[1,32], index: 4, kind: input, shape index: {}]
  %s5 = inlined_call_operand.vmem [shape: f32[16,24], index: 5, kind: input, shape index: {}]
  %s6 = inlined_call_operand.vmem [shape: f32[1,32], index: 6, kind: input, shape index: {}]
  %s7 = inlined_call_operand.vmem [shape: f32[1,32], index: 7, kind: input, shape index: {}]
  %s8 = inlined_call_operand.hbm [shape: f32[2,32,32], index: 8, kind: output, shape index: {0}]
  %s9 = inlined_call_operand.hbm [shape: f32[2,24,32], index: 9, kind: output, shape index: {1}]
  %s10 = inlined_call_operand.hbm [shape: f32[2,24,32], index: 10, kind: output, shape index: {2}]
  %s11 = inlined_call_operand.hbm [shape: f32[2,24,32], index: 11, kind: output, shape index: {3}]
  %s12 = inlined_call_operand.hbm [shape: f32[2,2,32], index: 12, kind: output, shape index: {4}]
  %s13 = inlined_call_operand.hbm [shape: f32[2,2,32], index: 13, kind: output, shape index: {5}]
  %14 = xla_tuple %s8, %s9, %s10, %s11, %s12, %s13
  %s15 = sld [smem:[#allocation0]]
  $region105: #{distribution_block_forward.1} parent=0
    _
  %s17 = ssub.s32 1, %s15
  %s18 = scalar_select 0, %s17, %s15
  $region1: #{distribution_block_forward.1} parent=0
    #allocation2 [shape = 'u8[32768]{0}', space=vmem, size = 0x8000, scoped, tag = 'output window, operand 0']
    #allocation3 [shape = 's32[2]{0}', space=sflag, size = 0x8, scoped, tag = 'scoped memory for distribution_block_forward.1']
    #allocation4 [shape = 'u8[24576]{0}', space=vmem, size = 0x6000, scoped, tag = 'output window, operand 1']
    #allocation5 [shape = 's32[2]{0}', space=sflag, size = 0x8, scoped, tag = 'scoped memory for distribution_block_forward.1']
    #allocation6 [shape = 'u8[24576]{0}', space=vmem, size = 0x6000, scoped, tag = 'output window, operand 2']
    #allocation7 [shape = 'u8[24576]{0}', space=vmem, size = 0x6000, scoped, tag = 'output window, operand 3']
    #allocation8 [shape = 's32[2]{0}', space=sflag, size = 0x8, scoped, tag = 'scoped memory for distribution_block_forward.1']
    #allocation9 [shape = 'u8[2048]{0}', space=vmem, size = 0x800, scoped, tag = 'output window, operand 4']
    #allocation10 [shape = 'u8[2048]{0}', space=vmem, size = 0x800, scoped, tag = 'output window, operand 5']
    #allocation11 [shape = 's32[2]{0}', space=sflag, size = 0x8, scoped, tag = 'scoped memory for distribution_block_forward.1']
    %19 = vsyncpa [#allocation3], 0
    %s20 = scalar_lea.sflag [#allocation3], 1
    %21 = vsyncpa %s20, 0
    %22 = vsyncpa [#allocation5], 0
    %s23 = scalar_lea.sflag [#allocation5], 1
    %24 = vsyncpa %s23, 0
    %25 = vsyncpa [#allocation8], 0
    %s26 = scalar_lea.sflag [#allocation8], 1
    %27 = vsyncpa %s26, 0
    %28 = vsyncpa [#allocation11], 0
    %s29 = scalar_lea.sflag [#allocation11], 1
    %30 = vsyncpa %s29, 0
    loop: start=0, step=1, limit=4
    $region2: #{distribution_block_forward.1} parent=1 // loop_pre_header
      _
    $region3: #{distribution_block_forward.1} parent=1 // loop_header
      %s32 = sphi 0, %s36
      %p33 = scmp.ge.s32.totalorder %s32, 4
      %s42 = sphi 0, %s44
      %s45 = sphi 0, %s42
      %s46 = sphi 0, %s45
      %s62 = sphi 0, %s46
      %s68 = sphi 0, %s70
      %s71 = sphi 0, %s68
      %s72 = sphi 0, %s71
      %s88 = sphi 0, %s72
      %s92 = sphi 0, %s92
      %s94 = sphi 0, %s92
      %s95 = sphi 0, %s94
      %s109 = sphi 0, %s95
      %s113 = sphi 0, %s113
      %s115 = sphi 0, %s113
      %s116 = sphi 0, %s115
      %s130 = sphi 0, %s116
      %s134 = sphi 0, %s134
      %s136 = sphi 0, %s134
      %s137 = sphi 0, %s136
      %s151 = sphi 0, %s137
      %s155 = sphi 0, %s155
      %s157 = sphi 0, %s155
      %s158 = sphi 0, %s157
      %s172 = sphi 0, %s158
      %s176 = sphi 0, %s176
      %s178 = sphi 0, %s176
      %s179 = sphi 0, %s178
      %s193 = sphi 0, %s179
      %s197 = sphi 0, %s197
      %s199 = sphi 0, %s197
      %s200 = sphi 0, %s199
      %s214 = sphi 0, %s200
      %s220 = sphi 0, %s222
      %s223 = sphi 0, %s220
      %s224 = sphi 0, %s223
      %s240 = sphi 0, %s224
      %s246 = sphi 0, %s248
      %s249 = sphi 0, %s246
      %s250 = sphi 0, %s249
      %s266 = sphi 0, %s250
      %s272 = sphi 0, %s274
      %s275 = sphi 0, %s272
      %s276 = sphi 0, %s275
      %s292 = sphi 0, %s276
      %s298 = sphi 0, %s300
      %s301 = sphi 0, %s298
      %s302 = sphi 0, %s301
      %s318 = sphi 0, %s302
      %s324 = sphi 0, %s326
      %s327 = sphi 0, %s324
      %s328 = sphi 0, %s327
      %s344 = sphi 0, %s328
      %s350 = sphi 0, %s352
      %s353 = sphi 0, %s350
      %s354 = sphi 0, %s353
      %s370 = sphi 0, %s354
    $region4: #{distribution_block_forward.1} parent=1 // loop_header_branch
      %35 = sbr.rel (%p33) target = $region8
    $region5: #{distribution_block_forward.1} parent=1 // loop_body
      %s37 = ssub.s32 %s32, 1
      %s38 = ssub.s32 %s32, 2
      %s39 = sadd.s32 %s32, 1
      %s40 = ssub.s32 %s32, %s39
      %p41 = scmp.eq.s32.totalorder %s40, 0
      %s43 = sadd.s32 %s42, 1
      %s44 = scalar_select %p41, %s42, %s43
      %p47 = pneg %p41
      %p48 = scmp.eq.s32.totalorder %s32, 1
      %p49 = por %p47, %p48
      %p50 = scmp.ne.s32.totalorder %s42, %s45
      %p51 = scmp.eq.s32.totalorder %s32, 0
      %p52 = por %p50, %p51
      %p53 = scmp.ne.s32.totalorder %s42, %s45
      %p54 = scmp.eq.s32.totalorder %s37, 1
      %p55 = por %p53, %p54
      %p56 = scmp.ne.s32.totalorder %s45, %s46
      %p57 = scmp.eq.s32.totalorder %s37, 0
      %p58 = por %p56, %p57
      %p59 = scmp.ne.s32.totalorder %s45, %s46
      %p60 = scmp.eq.s32.totalorder %s38, 1
      %p61 = por %p59, %p60
      %p63 = scmp.ne.s32.totalorder %s46, %s62
      %p64 = scmp.eq.s32.totalorder %s38, 0
      %p65 = por %p63, %p64
      %s66 = ssub.s32 %s32, %s39
      %p67 = scmp.eq.s32.totalorder %s66, 0
      %s69 = sadd.s32 %s68, 1
      %s70 = scalar_select %p67, %s68, %s69
      %p73 = pneg %p67
      %p74 = scmp.eq.s32.totalorder %s32, 1
      %p75 = por %p73, %p74
      %p76 = scmp.ne.s32.totalorder %s68, %s71
      %p77 = scmp.eq.s32.totalorder %s32, 0
      %p78 = por %p76, %p77
      %p79 = scmp.ne.s32.totalorder %s68, %s71
      %p80 = scmp.eq.s32.totalorder %s37, 1
      %p81 = por %p79, %p80
      %p82 = scmp.ne.s32.totalorder %s71, %s72
      %p83 = scmp.eq.s32.totalorder %s37, 0
      %p84 = por %p82, %p83
      %p85 = scmp.ne.s32.totalorder %s71, %s72
      %p86 = scmp.eq.s32.totalorder %s38, 1
      %p87 = por %p85, %p86
      %p89 = scmp.ne.s32.totalorder %s72, %s88
      %p90 = scmp.eq.s32.totalorder %s38, 0
      %p91 = por %p89, %p90
      %s93 = sadd.s32 %s92, 1
      %p96 = scmp.eq.s32.totalorder %s32, 1
      %p97 = scmp.ne.s32.totalorder %s92, %s94
      %p98 = scmp.eq.s32.totalorder %s32, 0
      %p99 = por %p97, %p98
      %p100 = scmp.ne.s32.totalorder %s92, %s94
      %p101 = scmp.eq.s32.totalorder %s37, 1
      %p102 = por %p100, %p101
      %p103 = scmp.ne.s32.totalorder %s94, %s95
      %p104 = scmp.eq.s32.totalorder %s37, 0
      %p105 = por %p103, %p104
      %p106 = scmp.ne.s32.totalorder %s94, %s95
      %p107 = scmp.eq.s32.totalorder %s38, 1
      %p108 = por %p106, %p107
      %p110 = scmp.ne.s32.totalorder %s95, %s109
      %p111 = scmp.eq.s32.totalorder %s38, 0
      %p112 = por %p110, %p111
      %s114 = sadd.s32 %s113, 1
      %p117 = scmp.eq.s32.totalorder %s32, 1
      %p118 = scmp.ne.s32.totalorder %s113, %s115
      %p119 = scmp.eq.s32.totalorder %s32, 0
      %p120 = por %p118, %p119
      %p121 = scmp.ne.s32.totalorder %s113, %s115
      %p122 = scmp.eq.s32.totalorder %s37, 1
      %p123 = por %p121, %p122
      %p124 = scmp.ne.s32.totalorder %s115, %s116
      %p125 = scmp.eq.s32.totalorder %s37, 0
      %p126 = por %p124, %p125
      %p127 = scmp.ne.s32.totalorder %s115, %s116
      %p128 = scmp.eq.s32.totalorder %s38, 1
      %p129 = por %p127, %p128
      %p131 = scmp.ne.s32.totalorder %s116, %s130
      %p132 = scmp.eq.s32.totalorder %s38, 0
      %p133 = por %p131, %p132
      %s135 = sadd.s32 %s134, 1
      %p138 = scmp.eq.s32.totalorder %s32, 1
      %p139 = scmp.ne.s32.totalorder %s134, %s136
      %p140 = scmp.eq.s32.totalorder %s32, 0
      %p141 = por %p139, %p140
      %p142 = scmp.ne.s32.totalorder %s134, %s136
      %p143 = scmp.eq.s32.totalorder %s37, 1
      %p144 = por %p142, %p143
      %p145 = scmp.ne.s32.totalorder %s136, %s137
      %p146 = scmp.eq.s32.totalorder %s37, 0
      %p147 = por %p145, %p146
      %p148 = scmp.ne.s32.totalorder %s136, %s137
      %p149 = scmp.eq.s32.totalorder %s38, 1
      %p150 = por %p148, %p149
      %p152 = scmp.ne.s32.totalorder %s137, %s151
      %p153 = scmp.eq.s32.totalorder %s38, 0
      %p154 = por %p152, %p153
      %s156 = sadd.s32 %s155, 1
      %p159 = scmp.eq.s32.totalorder %s32, 1
      %p160 = scmp.ne.s32.totalorder %s155, %s157
      %p161 = scmp.eq.s32.totalorder %s32, 0
      %p162 = por %p160, %p161
      %p163 = scmp.ne.s32.totalorder %s155, %s157
      %p164 = scmp.eq.s32.totalorder %s37, 1
      %p165 = por %p163, %p164
      %p166 = scmp.ne.s32.totalorder %s157, %s158
      %p167 = scmp.eq.s32.totalorder %s37, 0
      %p168 = por %p166, %p167
      %p169 = scmp.ne.s32.totalorder %s157, %s158
      %p170 = scmp.eq.s32.totalorder %s38, 1
      %p171 = por %p169, %p170
      %p173 = scmp.ne.s32.totalorder %s158, %s172
      %p174 = scmp.eq.s32.totalorder %s38, 0
      %p175 = por %p173, %p174
      %s177 = sadd.s32 %s176, 1
      %p180 = scmp.eq.s32.totalorder %s32, 1
      %p181 = scmp.ne.s32.totalorder %s176, %s178
      %p182 = scmp.eq.s32.totalorder %s32, 0
      %p183 = por %p181, %p182
      %p184 = scmp.ne.s32.totalorder %s176, %s178
      %p185 = scmp.eq.s32.totalorder %s37, 1
      %p186 = por %p184, %p185
      %p187 = scmp.ne.s32.totalorder %s178, %s179
      %p188 = scmp.eq.s32.totalorder %s37, 0
      %p189 = por %p187, %p188
      %p190 = scmp.ne.s32.totalorder %s178, %s179
      %p191 = scmp.eq.s32.totalorder %s38, 1
      %p192 = por %p190, %p191
      %p194 = scmp.ne.s32.totalorder %s179, %s193
      %p195 = scmp.eq.s32.totalorder %s38, 0
      %p196 = por %p194, %p195
      %s198 = sadd.s32 %s197, 1
      %p201 = scmp.eq.s32.totalorder %s32, 1
      %p202 = scmp.ne.s32.totalorder %s197, %s199
      %p203 = scmp.eq.s32.totalorder %s32, 0
      %p204 = por %p202, %p203
      %p205 = scmp.ne.s32.totalorder %s197, %s199
      %p206 = scmp.eq.s32.totalorder %s37, 1
      %p207 = por %p205, %p206
      %p208 = scmp.ne.s32.totalorder %s199, %s200
      %p209 = scmp.eq.s32.totalorder %s37, 0
      %p210 = por %p208, %p209
      %p211 = scmp.ne.s32.totalorder %s199, %s200
      %p212 = scmp.eq.s32.totalorder %s38, 1
      %p213 = por %p211, %p212
      %p215 = scmp.ne.s32.totalorder %s200, %s214
      %p216 = scmp.eq.s32.totalorder %s38, 0
      %p217 = por %p215, %p216
      %s218 = ssub.s32 %s32, %s39
      %p219 = scmp.eq.s32.totalorder %s218, 0
      %s221 = sadd.s32 %s220, 1
      %s222 = scalar_select %p219, %s220, %s221
      %p225 = pneg %p219
      %p226 = scmp.eq.s32.totalorder %s32, 1
      %p227 = por %p225, %p226
      %p228 = scmp.ne.s32.totalorder %s220, %s223
      %p229 = scmp.eq.s32.totalorder %s32, 0
      %p230 = por %p228, %p229
      %p231 = scmp.ne.s32.totalorder %s220, %s223
      %p232 = scmp.eq.s32.totalorder %s37, 1
      %p233 = por %p231, %p232
      %p234 = scmp.ne.s32.totalorder %s223, %s224
      %p235 = scmp.eq.s32.totalorder %s37, 0
      %p236 = por %p234, %p235
      %p237 = scmp.ne.s32.totalorder %s223, %s224
      %p238 = scmp.eq.s32.totalorder %s38, 1
      %p239 = por %p237, %p238
      %p241 = scmp.ne.s32.totalorder %s224, %s240
      %p242 = scmp.eq.s32.totalorder %s38, 0
      %p243 = por %p241, %p242
      %s244 = ssub.s32 %s32, %s39
      %p245 = scmp.eq.s32.totalorder %s244, 0
      %s247 = sadd.s32 %s246, 1
      %s248 = scalar_select %p245, %s246, %s247
      %p251 = pneg %p245
      %p252 = scmp.eq.s32.totalorder %s32, 1
      %p253 = por %p251, %p252
      %p254 = scmp.ne.s32.totalorder %s246, %s249
      %p255 = scmp.eq.s32.totalorder %s32, 0
      %p256 = por %p254, %p255
      %p257 = scmp.ne.s32.totalorder %s246, %s249
      %p258 = scmp.eq.s32.totalorder %s37, 1
      %p259 = por %p257, %p258
      %p260 = scmp.ne.s32.totalorder %s249, %s250
      %p261 = scmp.eq.s32.totalorder %s37, 0
      %p262 = por %p260, %p261
      %p263 = scmp.ne.s32.totalorder %s249, %s250
      %p264 = scmp.eq.s32.totalorder %s38, 1
      %p265 = por %p263, %p264
      %p267 = scmp.ne.s32.totalorder %s250, %s266
      %p268 = scmp.eq.s32.totalorder %s38, 0
      %p269 = por %p267, %p268
      %s270 = ssub.s32 %s32, %s39
      %p271 = scmp.eq.s32.totalorder %s270, 0
      %s273 = sadd.s32 %s272, 1
      %s274 = scalar_select %p271, %s272, %s273
      %p277 = pneg %p271
      %p278 = scmp.eq.s32.totalorder %s32, 1
      %p279 = por %p277, %p278
      %p280 = scmp.ne.s32.totalorder %s272, %s275
      %p281 = scmp.eq.s32.totalorder %s32, 0
      %p282 = por %p280, %p281
      %p283 = scmp.ne.s32.totalorder %s272, %s275
      %p284 = scmp.eq.s32.totalorder %s37, 1
      %p285 = por %p283, %p284
      %p286 = scmp.ne.s32.totalorder %s275, %s276
      %p287 = scmp.eq.s32.totalorder %s37, 0
      %p288 = por %p286, %p287
      %p289 = scmp.ne.s32.totalorder %s275, %s276
      %p290 = scmp.eq.s32.totalorder %s38, 1
      %p291 = por %p289, %p290
      %p293 = scmp.ne.s32.totalorder %s276, %s292
      %p294 = scmp.eq.s32.totalorder %s38, 0
      %p295 = por %p293, %p294
      %s296 = ssub.s32 %s32, %s39
      %p297 = scmp.eq.s32.totalorder %s296, 0
      %s299 = sadd.s32 %s298, 1
      %s300 = scalar_select %p297, %s298, %s299
      %p303 = pneg %p297
      %p304 = scmp.eq.s32.totalorder %s32, 1
      %p305 = por %p303, %p304
      %p306 = scmp.ne.s32.totalorder %s298, %s301
      %p307 = scmp.eq.s32.totalorder %s32, 0
      %p308 = por %p306, %p307
      %p309 = scmp.ne.s32.totalorder %s298, %s301
      %p310 = scmp.eq.s32.totalorder %s37, 1
      %p311 = por %p309, %p310
      %p312 = scmp.ne.s32.totalorder %s301, %s302
      %p313 = scmp.eq.s32.totalorder %s37, 0
      %p314 = por %p312, %p313
      %p315 = scmp.ne.s32.totalorder %s301, %s302
      %p316 = scmp.eq.s32.totalorder %s38, 1
      %p317 = por %p315, %p316
      %p319 = scmp.ne.s32.totalorder %s302, %s318
      %p320 = scmp.eq.s32.totalorder %s38, 0
      %p321 = por %p319, %p320
      %s322 = ssub.s32 %s32, %s39
      %p323 = scmp.eq.s32.totalorder %s322, 0
      %s325 = sadd.s32 %s324, 1
      %s326 = scalar_select %p323, %s324, %s325
      %p329 = pneg %p323
      %p330 = scmp.eq.s32.totalorder %s32, 1
      %p331 = por %p329, %p330
      %p332 = scmp.ne.s32.totalorder %s324, %s327
      %p333 = scmp.eq.s32.totalorder %s32, 0
      %p334 = por %p332, %p333
      %p335 = scmp.ne.s32.totalorder %s324, %s327
      %p336 = scmp.eq.s32.totalorder %s37, 1
      %p337 = por %p335, %p336
      %p338 = scmp.ne.s32.totalorder %s327, %s328
      %p339 = scmp.eq.s32.totalorder %s37, 0
      %p340 = por %p338, %p339
      %p341 = scmp.ne.s32.totalorder %s327, %s328
      %p342 = scmp.eq.s32.totalorder %s38, 1
      %p343 = por %p341, %p342
      %p345 = scmp.ne.s32.totalorder %s328, %s344
      %p346 = scmp.eq.s32.totalorder %s38, 0
      %p347 = por %p345, %p346
      %s348 = ssub.s32 %s32, %s39
      %p349 = scmp.eq.s32.totalorder %s348, 0
      %s351 = sadd.s32 %s350, 1
      %s352 = scalar_select %p349, %s350, %s351
      %p355 = pneg %p349
      %p356 = scmp.eq.s32.totalorder %s32, 1
      %p357 = por %p355, %p356
      %p358 = scmp.ne.s32.totalorder %s350, %s353
      %p359 = scmp.eq.s32.totalorder %s32, 0
      %p360 = por %p358, %p359
      %p361 = scmp.ne.s32.totalorder %s350, %s353
      %p362 = scmp.eq.s32.totalorder %s37, 1
      %p363 = por %p361, %p362
      %p364 = scmp.ne.s32.totalorder %s353, %s354
      %p365 = scmp.eq.s32.totalorder %s37, 0
      %p366 = por %p364, %p365
      %p367 = scmp.ne.s32.totalorder %s353, %s354
      %p368 = scmp.eq.s32.totalorder %s38, 1
      %p369 = por %p367, %p368
      %p371 = scmp.ne.s32.totalorder %s354, %s370
      %p372 = scmp.eq.s32.totalorder %s38, 0
      %p373 = por %p371, %p372
      %p374 = scmp.le.s32.totalorder 1, %s32
      %p375 = scmp.lt.s32.totalorder %s32, 3
      %p376 = pnand %p374, %p375
      %p377 = pneg %p376
      // Predicated region
      $region9: #{distribution_block_forward.1} parent=5 // pred_check
        _
      $region10: #{distribution_block_forward.1} parent=5 // pred_check_branch
        %379 = sbr.rel (%p376) target = $region12
      $region11: #{distribution_block_forward.1} parent=5 // pred_region
        %s380 = ssub.s32 %s32, 1
        // Predicated region
        $region13: #{distribution_block_forward.1} parent=11 // pred_check
          %p381 = pneg %p105
        $region14: #{distribution_block_forward.1} parent=11 // pred_check_branch
          %383 = sbr.rel (%p381) target = $region16
        $region15: #{distribution_block_forward.1} parent=11 // pred_region
          _
        $region16: #{distribution_block_forward.1} parent=11 // pred_fallthru
          _
        // Predicated region
        $region17: #{distribution_block_forward.1} parent=11 // pred_check
          %p384 = pneg %p126
        $region18: #{distribution_block_forward.1} parent=11 // pred_check_branch
          %386 = sbr.rel (%p384) target = $region20
        $region19: #{distribution_block_forward.1} parent=11 // pred_region
          _
        $region20: #{distribution_block_forward.1} parent=11 // pred_fallthru
          _
        // Predicated region
        $region21: #{distribution_block_forward.1} parent=11 // pred_check
          %p387 = pneg %p147
        $region22: #{distribution_block_forward.1} parent=11 // pred_check_branch
          %389 = sbr.rel (%p387) target = $region24
        $region23: #{distribution_block_forward.1} parent=11 // pred_region
          _
        $region24: #{distribution_block_forward.1} parent=11 // pred_fallthru
          _
        // Predicated region
        $region25: #{distribution_block_forward.1} parent=11 // pred_check
          %p390 = pneg %p168
        $region26: #{distribution_block_forward.1} parent=11 // pred_check_branch
          %392 = sbr.rel (%p390) target = $region28
        $region27: #{distribution_block_forward.1} parent=11 // pred_region
          _
        $region28: #{distribution_block_forward.1} parent=11 // pred_fallthru
          _
        // Predicated region
        $region29: #{distribution_block_forward.1} parent=11 // pred_check
          %p393 = pneg %p189
        $region30: #{distribution_block_forward.1} parent=11 // pred_check_branch
          %395 = sbr.rel (%p393) target = $region32
        $region31: #{distribution_block_forward.1} parent=11 // pred_region
          _
        $region32: #{distribution_block_forward.1} parent=11 // pred_fallthru
          _
        // Predicated region
        $region33: #{distribution_block_forward.1} parent=11 // pred_check
          %p396 = pneg %p210
        $region34: #{distribution_block_forward.1} parent=11 // pred_check_branch
          %398 = sbr.rel (%p396) target = $region36
        $region35: #{distribution_block_forward.1} parent=11 // pred_region
          _
        $region36: #{distribution_block_forward.1} parent=11 // pred_fallthru
          _
      $region12: #{distribution_block_forward.1} parent=5 // pred_fallthru
        _
      %p399 = scmp.lt.s32.totalorder %s32, 2
      // Predicated region
      $region37: #{distribution_block_forward.1} parent=5 // pred_check
        %p400 = pneg %p399
      $region38: #{distribution_block_forward.1} parent=5 // pred_check_branch
        %402 = sbr.rel (%p400) target = $region40
      $region39: #{distribution_block_forward.1} parent=5 // pred_region
        // Predicated region
        $region41: #{distribution_block_forward.1} parent=39 // pred_check
          %p403 = pneg %p52
        $region42: #{distribution_block_forward.1} parent=39 // pred_check_branch
          %405 = sbr.rel (%p403) target = $region44
        $region43: #{distribution_block_forward.1} parent=39 // pred_region
          %p406 = scmp.lt.s32.totalorder %s32, 1
          %s407 = scalar_select %p406, %s32, 1
          %s408 = smul.addr %s407, 4
          %s409 = smul.addr %s408, 8
          %s410 = scalar_lea.vmem %s0, %s409
        $region44: #{distribution_block_forward.1} parent=39 // pred_fallthru
          _
        // Predicated region
        $region45: #{distribution_block_forward.1} parent=39 // pred_check
          %p411 = pneg %p78
        $region46: #{distribution_block_forward.1} parent=39 // pred_check_branch
          %413 = sbr.rel (%p411) target = $region48
        $region47: #{distribution_block_forward.1} parent=39 // pred_region
          %p414 = scmp.lt.s32.totalorder %s32, 1
          %s415 = scalar_select %p414, %s32, 1
          %s416 = smul.addr %s415, 3
          %s417 = smul.addr %s416, 8
          %s418 = scalar_lea.vmem %s1, %s417
        $region48: #{distribution_block_forward.1} parent=39 // pred_fallthru
          _
      $region40: #{distribution_block_forward.1} parent=5 // pred_fallthru
        _
      %p419 = scmp.le.s32.totalorder 1, %s32
      %p420 = scmp.lt.s32.totalorder %s32, 3
      %p421 = pnand %p419, %p420
      %p422 = pneg %p421
      // Predicated region
      $region49: #{distribution_block_forward.1} parent=5 // pred_check
        _
      $region50: #{distribution_block_forward.1} parent=5 // pred_check_branch
        %424 = sbr.rel (%p421) target = $region52
      $region51: #{distribution_block_forward.1} parent=5 // pred_region
        %s425 = ssub.s32 %s32, 1
        %p426 = scmp.lt.s32.totalorder %s37, 1
        %s427 = scalar_select %p426, %s37, 1
        %s428 = smul.addr %s427, 4
        %s429 = smul.addr %s428, 8
        %s430 = scalar_lea.vmem %s0, %s429
        %p431 = pneg %p58
        %p432 = pneg %p55
        %p433 = scmp.lt.s32.totalorder %s37, 1
        %s434 = scalar_select %p433, %s37, 1
        %s435 = smul.addr %s434, 3
        %s436 = smul.addr %s435, 8
        %s437 = scalar_lea.vmem %s1, %s436
        %p438 = pneg %p84
        %p439 = pneg %p81
        %p440 = pneg %p105
        %p441 = pneg %p102
        %p442 = pneg %p126
        %p443 = pneg %p123
        %p444 = pneg %p147
        %p445 = pneg %p144
        %p446 = pneg %p168
        %p447 = pneg %p165
        %p448 = pneg %p189
        %p449 = pneg %p186
        %p450 = pneg %p210
        %p451 = pneg %p207
        %p452 = pneg %p236
        %p453 = pneg %p233
        %s454 = sand.u32 %s223, 1
        %s455 = scalar_lea.sflag [#allocation3], %s454
        %s456 = sand.u32 %s223, 1
        %s457 = smul.addr %s456, 32
        %s458 = scalar_lea.vmem [#allocation2], %s457
        %p459 = pneg %p262
        %p460 = pneg %p259
        %s461 = sand.u32 %s37, 1
        %s462 = scalar_lea.sflag [#allocation5], %s461
        %s463 = sand.u32 %s249, 1
        %s464 = smul.addr %s463, 24
        %s465 = scalar_lea.vmem [#allocation4], %s464
        %p466 = pneg %p288
        %p467 = pneg %p285
        %s468 = sand.u32 %s37, 1
        %s469 = scalar_lea.sflag [#allocation5], %s468
        %s470 = sand.u32 %s275, 1
        %s471 = smul.addr %s470, 24
        %s472 = scalar_lea.vmem [#allocation6], %s471
        %p473 = pneg %p314
        %p474 = pneg %p311
        %s475 = sand.u32 %s37, 1
        %s476 = scalar_lea.sflag [#allocation8], %s475
        %s477 = sand.u32 %s301, 1
        %s478 = smul.addr %s477, 24
        %s479 = scalar_lea.vmem [#allocation7], %s478
        %p480 = pneg %p340
        %p481 = pneg %p337
        %s482 = sand.u32 %s37, 1
        %s483 = scalar_lea.sflag [#allocation8], %s482
        %s484 = sand.u32 %s327, 1
        %s485 = smul.addr %s484, 2
        %s486 = scalar_lea.vmem [#allocation9], %s485
        %p487 = pneg %p366
        %p488 = pneg %p363
        %s489 = sand.u32 %s353, 1
        %s490 = scalar_lea.sflag [#allocation11], %s489
        %s491 = sand.u32 %s353, 1
        %s492 = smul.addr %s491, 2
        %s493 = scalar_lea.vmem [#allocation10], %s492
        %p494 = scmp.lt.s32.totalorder %s37, 1
        %s495 = scalar_select %p494, %s37, 1
        %s496 = smul.addr %s495, 4
        %s497 = smul.addr %s496, 8
        %s498 = scalar_lea.vmem %s0, %s497
        %p499 = scmp.lt.s32.totalorder %s37, 1
        %s500 = scalar_select %p499, %s37, 1
        %s501 = smul.addr %s500, 3
        %s502 = smul.addr %s501, 8
        %s503 = scalar_lea.vmem %s1, %s502
        %v504 = vld [vmem:[%s498] sm:$0xff]
        %v505 = vld [vmem:[%s498 + $0x8] sm:$0xff]
        %v506 = vld [vmem:[%s498 + $0x10] sm:$0xff]
        %v507 = vld [vmem:[%s498 + $0x18] sm:$0xff]
        %vm508 = vcmask 261120
        %v509 = vsel %vm508, %v504, 0.0
        %v510 = vrot.slane %v509, 4
        %v511 = vadd.f32 %v509, %v510
        %v512 = vrot.slane %v511, 2
        %v513 = vadd.f32 %v511, %v512
        %v514 = vrot.slane %v513, 1
        %v515 = vadd.f32 %v513, %v514
        %v516 = vsel %vm508, %v505, 0.0
        %v517 = vrot.slane %v516, 4
        %v518 = vadd.f32 %v516, %v517
        %v519 = vrot.slane %v518, 2
        %v520 = vadd.f32 %v518, %v519
        %v521 = vrot.slane %v520, 1
        %v522 = vadd.f32 %v520, %v521
        %v523 = vsel %vm508, %v506, 0.0
        %v524 = vrot.slane %v523, 4
        %v525 = vadd.f32 %v523, %v524
        %v526 = vrot.slane %v525, 2
        %v527 = vadd.f32 %v525, %v526
        %v528 = vrot.slane %v527, 1
        %v529 = vadd.f32 %v527, %v528
        %v530 = vsel %vm508, %v507, 0.0
        %v531 = vrot.slane %v530, 4
        %v532 = vadd.f32 %v530, %v531
        %v533 = vrot.slane %v532, 2
        %v534 = vadd.f32 %v532, %v533
        %v535 = vrot.slane %v534, 1
        %v536 = vadd.f32 %v534, %v535
        %v537 = vrcp.pop 8.0
        %v538 = vmul.f32 %v515, %v537
        %v539 = vmul.f32 %v522, %v537
        %v540 = vmul.f32 %v529, %v537
        %v541 = vmul.f32 %v536, %v537
        %v542 = vmul.f32 %v504, %v504
        %v543 = vmul.f32 %v505, %v505
        %v544 = vmul.f32 %v506, %v506
        %v545 = vmul.f32 %v507, %v507
        %v546 = vsel %vm508, %v542, 0.0
        %v547 = vrot.slane %v546, 4
        %v548 = vadd.f32 %v546, %v547
        %v549 = vrot.slane %v548, 2
        %v550 = vadd.f32 %v548, %v549
        %v551 = vrot.slane %v550, 1
        %v552 = vadd.f32 %v550, %v551
        %v553 = vsel %vm508, %v543, 0.0
        %v554 = vrot.slane %v553, 4
        %v555 = vadd.f32 %v553, %v554
        %v556 = vrot.slane %v555, 2
        %v557 = vadd.f32 %v555, %v556
        %v558 = vrot.slane %v557, 1
        %v559 = vadd.f32 %v557, %v558
        %v560 = vsel %vm508, %v544, 0.0
        %v561 = vrot.slane %v560, 4
        %v562 = vadd.f32 %v560, %v561
        %v563 = vrot.slane %v562, 2
        %v564 = vadd.f32 %v562, %v563
        %v565 = vrot.slane %v564, 1
        %v566 = vadd.f32 %v564, %v565
        %v567 = vsel %vm508, %v545, 0.0
        %v568 = vrot.slane %v567, 4
        %v569 = vadd.f32 %v567, %v568
        %v570 = vrot.slane %v569, 2
        %v571 = vadd.f32 %v569, %v570
        %v572 = vrot.slane %v571, 1
        %v573 = vadd.f32 %v571, %v572
        %v574 = vmul.f32 %v552, %v537
        %v575 = vmul.f32 %v559, %v537
        %v576 = vmul.f32 %v566, %v537
        %v577 = vmul.f32 %v573, %v537
        %v578 = vmul.f32 %v538, %v538
        %v579 = vmul.f32 %v539, %v539
        %v580 = vmul.f32 %v540, %v540
        %v581 = vmul.f32 %v541, %v541
        %v582 = vsub.f32 %v574, %v578
        %v583 = vsub.f32 %v575, %v579
        %v584 = vsub.f32 %v576, %v580
        %v585 = vsub.f32 %v577, %v581
        %v586 = vadd.f32 %v582, 1e-05
        %v587 = vadd.f32 %v583, 1e-05
        %v588 = vadd.f32 %v584, 1e-05
        %v589 = vadd.f32 %v585, 1e-05
        %v590 = vrsqrt.pop %v586
        %v591 = vrsqrt.pop %v587
        %v592 = vrsqrt.pop %v588
        %v593 = vrsqrt.pop %v589
        %v594 = vsub.f32 %v504, %v538
        %v595 = vsub.f32 %v505, %v539
        %v596 = vsub.f32 %v506, %v540
        %v597 = vsub.f32 %v507, %v541
        %v598 = vmul.f32 %v594, %v590
        %v599 = vmul.f32 %v595, %v591
        %v600 = vmul.f32 %v596, %v592
        %v601 = vmul.f32 %v597, %v593
        %602 = vst.msk [vmem:[%s458] sm:$0xff] %vm508, %v598
        %603 = vst.msk [vmem:[%s458 + $0x8] sm:$0xff] %vm508, %v599
        %604 = vst.msk [vmem:[%s458 + $0x10] sm:$0xff] %vm508, %v600
        %605 = vst.msk [vmem:[%s458 + $0x18] sm:$0xff] %vm508, %v601
        %v606 = vrsqrt.pop %v586
        %v607 = vmul.f32 %v586, %v606
        %vm608 = vcmp.eq.f32.partialorder %v586, inf
        %v609 = vsel %vm608, %v586, %v607
        %vm610 = vcmp.eq.f32.partialorder %v586, 0.0
        %v611 = vand.u32 %v586, 2147483648
        %v612 = vsel %vm610, %v611, %v609
        %v613 = vrsqrt.pop %v587
        %v614 = vmul.f32 %v587, %v613
        %vm615 = vcmp.eq.f32.partialorder %v587, inf
        %v616 = vsel %vm615, %v587, %v614
        %vm617 = vcmp.eq.f32.partialorder %v587, 0.0
        %v618 = vand.u32 %v587, 2147483648
        %v619 = vsel %vm617, %v618, %v616
        %v620 = vrsqrt.pop %v588
        %v621 = vmul.f32 %v588, %v620
        %vm622 = vcmp.eq.f32.partialorder %v588, inf
        %v623 = vsel %vm622, %v588, %v621
        %vm624 = vcmp.eq.f32.partialorder %v588, 0.0
        %v625 = vand.u32 %v588, 2147483648
        %v626 = vsel %vm624, %v625, %v623
        %v627 = vrsqrt.pop %v589
        %v628 = vmul.f32 %v589, %v627
        %vm629 = vcmp.eq.f32.partialorder %v589, inf
        %v630 = vsel %vm629, %v589, %v628
        %vm631 = vcmp.eq.f32.partialorder %v589, 0.0
        %v632 = vand.u32 %v589, 2147483648
        %v633 = vsel %vm631, %v632, %v630
        %v634 = vld [vmem:[%s503] sm:$0xff]
        %v635 = vld [vmem:[%s503 + $0x8] sm:$0xff]
        %v636 = vld [vmem:[%s503 + $0x10] sm:$0xff]
        %v637 = vsel %vm508, %v634, 0.0
        %v638 = vrot.slane %v637, 4
        %v639 = vadd.f32 %v637, %v638
        %v640 = vrot.slane %v639, 2
        %v641 = vadd.f32 %v639, %v640
        %v642 = vrot.slane %v641, 1
        %v643 = vadd.f32 %v641, %v642
        %v644 = vsel %vm508, %v635, 0.0
        %v645 = vrot.slane %v644, 4
        %v646 = vadd.f32 %v644, %v645
        %v647 = vrot.slane %v646, 2
        %v648 = vadd.f32 %v646, %v647
        %v649 = vrot.slane %v648, 1
        %v650 = vadd.f32 %v648, %v649
        %v651 = vsel %vm508, %v636, 0.0
        %v652 = vrot.slane %v651, 4
        %v653 = vadd.f32 %v651, %v652
        %v654 = vrot.slane %v653, 2
        %v655 = vadd.f32 %v653, %v654
        %v656 = vrot.slane %v655, 1
        %v657 = vadd.f32 %v655, %v656
        %v658 = vmul.f32 %v643, %v537
        %v659 = vmul.f32 %v650, %v537
        %v660 = vmul.f32 %v657, %v537
        %v661 = vmul.f32 %v634, %v634
        %v662 = vmul.f32 %v635, %v635
        %v663 = vmul.f32 %v636, %v636
        %v664 = vsel %vm508, %v661, 0.0
        %v665 = vrot.slane %v664, 4
        %v666 = vadd.f32 %v664, %v665
        %v667 = vrot.slane %v666, 2
        %v668 = vadd.f32 %v666, %v667
        %v669 = vrot.slane %v668, 1
        %v670 = vadd.f32 %v668, %v669
        %v671 = vsel %vm508, %v662, 0.0
        %v672 = vrot.slane %v671, 4
        %v673 = vadd.f32 %v671, %v672
        %v674 = vrot.slane %v673, 2
        %v675 = vadd.f32 %v673, %v674
        %v676 = vrot.slane %v675, 1
        %v677 = vadd.f32 %v675, %v676
        %v678 = vsel %vm508, %v663, 0.0
        %v679 = vrot.slane %v678, 4
        %v680 = vadd.f32 %v678, %v679
        %v681 = vrot.slane %v680, 2
        %v682 = vadd.f32 %v680, %v681
        %v683 = vrot.slane %v682, 1
        %v684 = vadd.f32 %v682, %v683
        %v685 = vmul.f32 %v670, %v537
        %v686 = vmul.f32 %v677, %v537
        %v687 = vmul.f32 %v684, %v537
        %v688 = vmul.f32 %v658, %v658
        %v689 = vmul.f32 %v659, %v659
        %v690 = vmul.f32 %v660, %v660
        %v691 = vsub.f32 %v685, %v688
        %v692 = vsub.f32 %v686, %v689
        %v693 = vsub.f32 %v687, %v690
        %v694 = vadd.f32 %v691, 1e-05
        %v695 = vadd.f32 %v692, 1e-05
        %v696 = vadd.f32 %v693, 1e-05
        %v697 = vrsqrt.pop %v694
        %v698 = vrsqrt.pop %v695
        %v699 = vrsqrt.pop %v696
        %v700 = vsub.f32 %v634, %v658
        %v701 = vsub.f32 %v635, %v659
        %v702 = vsub.f32 %v636, %v660
        %v703 = vmul.f32 %v700, %v697
        %v704 = vmul.f32 %v701, %v698
        %v705 = vmul.f32 %v702, %v699
        %706 = vst.msk [vmem:[%s465] sm:$0xff] %vm508, %v703
        %707 = vst.msk [vmem:[%s465 + $0x8] sm:$0xff] %vm508, %v704
        %708 = vst.msk [vmem:[%s465 + $0x10] sm:$0xff] %vm508, %v705
        %v709 = vrsqrt.pop %v694
        %v710 = vmul.f32 %v694, %v709
        %vm711 = vcmp.eq.f32.partialorder %v694, inf
        %v712 = vsel %vm711, %v694, %v710
        %vm713 = vcmp.eq.f32.partialorder %v694, 0.0
        %v714 = vand.u32 %v694, 2147483648
        %v715 = vsel %vm713, %v714, %v712
        %v716 = vrsqrt.pop %v695
        %v717 = vmul.f32 %v695, %v716
        %vm718 = vcmp.eq.f32.partialorder %v695, inf
        %v719 = vsel %vm718, %v695, %v717
        %vm720 = vcmp.eq.f32.partialorder %v695, 0.0
        %v721 = vand.u32 %v695, 2147483648
        %v722 = vsel %vm720, %v721, %v719
        %v723 = vrsqrt.pop %v696
        %v724 = vmul.f32 %v696, %v723
        %vm725 = vcmp.eq.f32.partialorder %v696, inf
        %v726 = vsel %vm725, %v696, %v724
        %vm727 = vcmp.eq.f32.partialorder %v696, 0.0
        %v728 = vand.u32 %v696, 2147483648
        %v729 = vsel %vm727, %v728, %v726
        %v730 = vld [vmem:[%s6] sm:$0x1]
        %v731 = vld [vmem:[%s7] sm:$0x1]
        %v733 = vlaneseq
        %v734 = vshrl.u32 %v733, 7
        %v735 = vsub.s32 0, %v734
        %v736 = vrot.slane %v730, %v735
        %vm741 = vcmask 1041409
        %v742 = vsel %vm741, %v659, %v658
        %vm743 = vcmask 1042434
        %v744 = vsel %vm743, %v660, %v742
        %v746 = vmul.f32 %v736, %v744
        %v749 = vunpack.c.l.s4 1966171168
        %v750 = vunpack.c.0.s8 %v749
        %v751 = vlaneseq
        %v752 = vshrl.u32 %v751, 7
        %v753 = vsub.s32 %v750, %v752
        %v754 = vrot.slane %v746, %v753
        %v756 = vunpack.c.l.s4 1966171168
        %v757 = vunpack.c.0.s8 %v756
        %v758 = vlaneseq
        %v759 = vshrl.u32 %v758, 7
        %v760 = vsub.s32 %v757, %v759
        %v761 = vrot.slane %v754, %v760
        %v762 = vlaneseq
        %v763 = vshrl.u32 %v762, 7
        %v764 = vsub.s32 0, %v763
        %v765 = vrot.slane %v761, %v764
        %v768 = vlaneseq
        %v769 = vshrl.u32 %v768, 7
        %v770 = vsub.s32 0, %v769
        %v771 = vrot.slane %v731, %v770
        %v776 = vsel %vm741, %v722, %v715
        %v777 = vsel %vm743, %v729, %v776
        %v779 = vmul.f32 %v771, %v777
        %v782 = vunpack.c.l.s4 1966171168
        %v783 = vunpack.c.0.s8 %v782
        %v784 = vlaneseq
        %v785 = vshrl.u32 %v784, 7
        %v786 = vsub.s32 %v783, %v785
        %v787 = vrot.slane %v779, %v786
        %v789 = vunpack.c.l.s4 1966171168
        %v790 = vunpack.c.0.s8 %v789
        %v791 = vlaneseq
        %v792 = vshrl.u32 %v791, 7
        %v793 = vsub.s32 %v790, %v792
        %v794 = vrot.slane %v787, %v793
        %v795 = vlaneseq
        %v796 = vshrl.u32 %v795, 7
        %v797 = vsub.s32 0, %v796
        %v798 = vrot.slane %v794, %v797
        %800 = vst.msk [vmem:[%s472] sm:$0xff] %vm508, %v765
        %801 = vst.msk [vmem:[%s479] sm:$0xff] %vm508, %v798
        %v806 = vsel %vm741, %v539, %v538
        %v807 = vsel %vm743, %v540, %v806
        %vm808 = vcmask 1043459
        %v809 = vsel %vm808, %v541, %v807
        %vm815 = vcmask 1045509
        %v816 = vsel %vm815, %v619, %v612
        %vm817 = vcmask 1046534
        %v818 = vsel %vm817, %v626, %v816
        %vm819 = vcmask 1047559
        %v820 = vsel %vm819, %v633, %v818
        %vm822 = vcmask 1043456
        %v823 = vsel %vm822, %v809, %v820
        %v824 = vld [vmem:[%s2] sm:$0xff]
        %v825 = vld [vmem:[%s2 + $0x8] sm:$0xff]
        %v826 = vld [vmem:[%s2 + $0x10] sm:$0xff]
        %v827 = vld [vmem:[%s2 + $0x18] sm:$0xff]
        %v828 = vld [vmem:[%s3] sm:$0x1]
        %v830 = vlaneseq
        %v831 = vshrl.u32 %v830, 7
        %v832 = vsub.s32 0, %v831
        %v833 = vrot.slane %v828, %v832
        %v836 = vsel %vm508, %v823, 0
        %838 = vmatprep.subr.mxu0 0.0
        %839 = vmatpush1.msra.mxu0 %v824
        %840 = vmatprep.subr.mxu0 0.0
        %841 = vmatpush1.msra.mxu0 %v825
        %842 = vmatprep.subr.mxu0 0.0
        %843 = vmatpush1.msra.mxu0 %v826
        %844 = vmatprep.subr.mxu0 0.0
        %845 = vmatpush1.msra.mxu0 %v827
        %846 = vmatprep.subr.mxu0 0.0
        %847 = vmatpush1.msra.mxu0 0.0
        %848 = vmatprep.subr.mxu0 0.0
        %849 = vmatpush1.msra.mxu0 0.0
        %850 = vmatprep.subr.mxu0 0.0
        %851 = vmatpush1.msra.mxu0 0.0
        %852 = vmatprep.subr.mxu0 0.0
        %853 = vmatpush1.msra.mxu0 0.0
        %854 = vmatprep.subr.mxu0 0.0
        %855 = vmatpush1.msra.mxu0 0.0
        %856 = vmatprep.subr.mxu0 0.0
        %857 = vmatpush1.msra.mxu0 0.0
        %858 = vmatprep.subr.mxu0 0.0
        %859 = vmatpush1.msra.mxu0 0.0
        %860 = vmatprep.subr.mxu0 0.0
        %861 = vmatpush1.msra.mxu0 0.0
        %862 = vmatprep.subr.mxu0 0.0
        %863 = vmatpush1.msra.mxu0 0.0
        %864 = vmatprep.subr.mxu0 0.0
        %865 = vmatpush1.msra.mxu0 0.0
        %866 = vmatprep.subr.mxu0 0.0
        %867 = vmatpush1.msra.mxu0 0.0
        %868 = vmatprep.subr.mxu0 0.0
        %869 = vmatpush1.msra.mxu0 0.0
        %870 = vmatprep.subr.mxu0 0.0
        %871 = vmatpush1.msra.mxu0 0.0
        %872 = vmatprep.subr.mxu0 0.0
        %873 = vmatpush1.msra.mxu0 0.0
        %874 = vmatprep.subr.mxu0 0.0
        %875 = vmatpush1.msra.mxu0 0.0
        %876 = vmatprep.subr.mxu0 0.0
        %877 = vmatpush1.msra.mxu0 0.0
        %878 = vmatprep.subr.mxu0 0.0
        %879 = vmatpush1.msra.mxu0 0.0
        %880 = vmatprep.subr.mxu0 0.0
        %881 = vmatpush1.msra.mxu0 0.0
        %882 = vmatprep.subr.mxu0 0.0
        %883 = vmatpush1.msra.mxu0 0.0
        %884 = vmatprep.subr.mxu0 0.0
        %885 = vmatpush1.msra.mxu0 0.0
        %886 = vmatprep.subr.mxu0 0.0
        %887 = vmatpush1.msra.mxu0 0.0
        %888 = vmatprep.subr.mxu0 0.0
        %889 = vmatpush1.msra.mxu0 0.0
        %890 = vmatprep.subr.mxu0 0.0
        %891 = vmatpush1.msra.mxu0 0.0
        %892 = vmatprep.subr.mxu0 0.0
        %893 = vmatpush1.msra.mxu0 0.0
        %894 = vmatprep.subr.mxu0 0.0
        %895 = vmatpush1.msra.mxu0 0.0
        %896 = vmatprep.subr.mxu0 0.0
        %897 = vmatpush1.msra.mxu0 0.0
        %898 = vmatprep.subr.mxu0 0.0
        %899 = vmatpush1.msra.mxu0 0.0
        %900 = vmatprep.subr.mxu0 0.0
        %901 = vmatpush1.msra.mxu0 0.0
        %902 = vmatprep.mubr.f32.mxu0 0.0
        %903 = vmatmul.mubr.f32.gmra.mrb[0].mxu0 %v836
        %v904 = vpop.f32.mrb[0].mxu0
        %v905 = vadd.f32 %v833, %v904
        %v906 = vpop.f32.mrb[0].mxu0
        %907 = vdwg.mxu0
        %909 = vrot.lane.b32.xlu0 %v905, 96
        %v910 = vpop.permute.xlu0 %909
        %v911 = vsel %vm508, %v905, 0
        %v913 = vsel %vm508, %v910, 0
        %915 = vmatprep.subr.mxu0 0.0
        %916 = vmatpush1.xpose.msra.mxu0 %v913
        %917 = vmatprep.subr.mxu0 0.0
        %918 = vmatpush1.xpose.msra.mxu0 0.0
        %919 = vmatprep.subr.mxu0 0.0
        %920 = vmatpush1.xpose.msra.mxu0 0.0
        %921 = vmatprep.subr.mxu0 0.0
        %922 = vmatpush1.xpose.msra.mxu0 0.0
        %923 = vmatprep.subr.mxu0 0.0
        %924 = vmatpush1.xpose.msra.mxu0 0.0
        %925 = vmatprep.subr.mxu0 0.0
        %926 = vmatpush1.xpose.msra.mxu0 0.0
        %927 = vmatprep.subr.mxu0 0.0
        %928 = vmatpush1.xpose.msra.mxu0 0.0
        %929 = vmatprep.subr.mxu0 0.0
        %930 = vmatpush1.xpose.msra.mxu0 0.0
        %931 = vmatprep.subr.mxu0 0.0
        %932 = vmatpush1.xpose.msra.mxu0 0.0
        %933 = vmatprep.subr.mxu0 0.0
        %934 = vmatpush1.xpose.msra.mxu0 0.0
        %935 = vmatprep.subr.mxu0 0.0
        %936 = vmatpush1.xpose.msra.mxu0 0.0
        %937 = vmatprep.subr.mxu0 0.0
        %938 = vmatpush1.xpose.msra.mxu0 0.0
        %939 = vmatprep.subr.mxu0 0.0
        %940 = vmatpush1.xpose.msra.mxu0 0.0
        %941 = vmatprep.subr.mxu0 0.0
        %942 = vmatpush1.xpose.msra.mxu0 0.0
        %943 = vmatprep.subr.mxu0 0.0
        %944 = vmatpush1.xpose.msra.mxu0 0.0
        %945 = vmatprep.subr.mxu0 0.0
        %946 = vmatpush1.xpose.msra.mxu0 0.0
        %947 = vmatprep.subr.mxu0 0.0
        %948 = vmatpush1.xpose.msra.mxu0 0.0
        %949 = vmatprep.subr.mxu0 0.0
        %950 = vmatpush1.xpose.msra.mxu0 0.0
        %951 = vmatprep.subr.mxu0 0.0
        %952 = vmatpush1.xpose.msra.mxu0 0.0
        %953 = vmatprep.subr.mxu0 0.0
        %954 = vmatpush1.xpose.msra.mxu0 0.0
        %955 = vmatprep.subr.mxu0 0.0
        %956 = vmatpush1.xpose.msra.mxu0 0.0
        %957 = vmatprep.subr.mxu0 0.0
        %958 = vmatpush1.xpose.msra.mxu0 0.0
        %959 = vmatprep.subr.mxu0 0.0
        %960 = vmatpush1.xpose.msra.mxu0 0.0
        %961 = vmatprep.subr.mxu0 0.0
        %962 = vmatpush1.xpose.msra.mxu0 0.0
        %963 = vmatprep.subr.mxu0 0.0
        %964 = vmatpush1.xpose.msra.mxu0 0.0
        %965 = vmatprep.subr.mxu0 0.0
        %966 = vmatpush1.xpose.msra.mxu0 0.0
        %967 = vmatprep.subr.mxu0 0.0
        %968 = vmatpush1.xpose.msra.mxu0 0.0
        %969 = vmatprep.subr.mxu0 0.0
        %970 = vmatpush1.xpose.msra.mxu0 0.0
        %971 = vmatprep.subr.mxu0 0.0
        %972 = vmatpush1.xpose.msra.mxu0 0.0
        %973 = vmatprep.subr.mxu0 0.0
        %974 = vmatpush1.xpose.msra.mxu0 0.0
        %975 = vmatprep.subr.mxu0 0.0
        %976 = vmatpush1.xpose.msra.mxu0 0.0
        %977 = vmatprep.subr.mxu0 0.0
        %978 = vmatpush1.xpose.msra.mxu0 0.0
        %979 = vmatprep.mubr.f32.mxu0 0.0
        %980 = vmatmul.mubr.f32.gmra.mrb[0].mxu0 %v911
        %v981 = vpop.f32.mrb[0].mxu0
        %v982 = vadd.f32 0.0, %v981
        %v983 = vpop.f32.mrb[0].mxu0
        %984 = vdwg.mxu0
        %v985 = vmul.f32 %v982, 0.17677669
        %v986 = vlaneseq
        %v987 = vshrl.u32 %v986, 7
        %v988 = vcvt.s32.f32 %v987
        %v989 = vrcp.pop 4.0
        %v990 = vmul.f32 %v988, %v989
        %v991 = vfloor.f32 %v990
        %v992 = vlaneseq
        %v993 = vand.u32 %v992, 127
        %v994 = vcvt.s32.f32 %v993
        %v995 = vmul.f32 %v994, %v989
        %v996 = vfloor.f32 %v995
        %vm997 = vcmp.eq.f32.partialorder %v991, %v996
        %v998 = vsel %vm997, %v985, -1e+30
        %vm999 = vcmask 64512
        %v1000 = vsel %vm999, %v998, -inf
        %1001 = vmax.xlane.f32.xlu0 %v1000
        %v1002 = vpop.xlane.xlu0 %1001
        %v1003 = vsub.f32 %v998, %v1002
        %v1004 = vmul.f32 %v1003, 1.442695
        %v1005 = vpow.pop %v1004
        %v1006 = vsel %vm999, %v1005, 0.0
        %1007 = vadd.xlane.f32.xlu0 %v1006
        %v1008 = vpop.xlane.xlu0 %1007
        %1009 = vrot.lane.b32.xlu0 %v905, 64
        %v1010 = vpop.permute.xlu0 %1009
        %v1013 = vsel %vm999, %v1005, 0
        %1015 = vmatprep.subr.mxu0 0.0
        %1016 = vmatpush1.msra.mxu0 %v1010
        %1017 = vmatprep.subr.mxu0 0.0
        %1018 = vmatpush1.msra.mxu0 0.0
        %1019 = vmatprep.subr.mxu0 0.0
        %1020 = vmatpush1.msra.mxu0 0.0
        %1021 = vmatprep.subr.mxu0 0.0
        %1022 = vmatpush1.msra.mxu0 0.0
        %1023 = vmatprep.subr.mxu0 0.0
        %1024 = vmatpush1.msra.mxu0 0.0
        %1025 = vmatprep.subr.mxu0 0.0
        %1026 = vmatpush1.msra.mxu0 0.0
        %1027 = vmatprep.subr.mxu0 0.0
        %1028 = vmatpush1.msra.mxu0 0.0
        %1029 = vmatprep.subr.mxu0 0.0
        %1030 = vmatpush1.msra.mxu0 0.0
        %1031 = vmatprep.subr.mxu0 0.0
        %1032 = vmatpush1.msra.mxu0 0.0
        %1033 = vmatprep.subr.mxu0 0.0
        %1034 = vmatpush1.msra.mxu0 0.0
        %1035 = vmatprep.subr.mxu0 0.0
        %1036 = vmatpush1.msra.mxu0 0.0
        %1037 = vmatprep.subr.mxu0 0.0
        %1038 = vmatpush1.msra.mxu0 0.0
        %1039 = vmatprep.subr.mxu0 0.0
        %1040 = vmatpush1.msra.mxu0 0.0
        %1041 = vmatprep.subr.mxu0 0.0
        %1042 = vmatpush1.msra.mxu0 0.0
        %1043 = vmatprep.subr.mxu0 0.0
        %1044 = vmatpush1.msra.mxu0 0.0
        %1045 = vmatprep.subr.mxu0 0.0
        %1046 = vmatpush1.msra.mxu0 0.0
        %1047 = vmatprep.subr.mxu0 0.0
        %1048 = vmatpush1.msra.mxu0 0.0
        %1049 = vmatprep.subr.mxu0 0.0
        %1050 = vmatpush1.msra.mxu0 0.0
        %1051 = vmatprep.subr.mxu0 0.0
        %1052 = vmatpush1.msra.mxu0 0.0
        %1053 = vmatprep.subr.mxu0 0.0
        %1054 = vmatpush1.msra.mxu0 0.0
        %1055 = vmatprep.subr.mxu0 0.0
        %1056 = vmatpush1.msra.mxu0 0.0
        %1057 = vmatprep.subr.mxu0 0.0
        %1058 = vmatpush1.msra.mxu0 0.0
        %1059 = vmatprep.subr.mxu0 0.0
        %1060 = vmatpush1.msra.mxu0 0.0
        %1061 = vmatprep.subr.mxu0 0.0
        %1062 = vmatpush1.msra.mxu0 0.0
        %1063 = vmatprep.subr.mxu0 0.0
        %1064 = vmatpush1.msra.mxu0 0.0
        %1065 = vmatprep.subr.mxu0 0.0
        %1066 = vmatpush1.msra.mxu0 0.0
        %1067 = vmatprep.subr.mxu0 0.0
        %1068 = vmatpush1.msra.mxu0 0.0
        %1069 = vmatprep.subr.mxu0 0.0
        %1070 = vmatpush1.msra.mxu0 0.0
        %1071 = vmatprep.subr.mxu0 0.0
        %1072 = vmatpush1.msra.mxu0 0.0
        %1073 = vmatprep.subr.mxu0 0.0
        %1074 = vmatpush1.msra.mxu0 0.0
        %1075 = vmatprep.subr.mxu0 0.0
        %1076 = vmatpush1.msra.mxu0 0.0
        %1077 = vmatprep.subr.mxu0 0.0
        %1078 = vmatpush1.msra.mxu0 0.0
        %1079 = vmatprep.mubr.f32.mxu0 0.0
        %1080 = vmatmul.mubr.f32.gmra.mrb[0].mxu0 %v1013
        %v1081 = vpop.f32.mrb[0].mxu0
        %v1082 = vadd.f32 0.0, %v1081
        %v1083 = vpop.f32.mrb[0].mxu0
        %1084 = vdwg.mxu0
        %v1085 = vrcp.pop %v1008
        %v1086 = vmul.f32 %v1082, %v1085
        %v1087 = vld [vmem:[%s4] sm:$0x1]
        %v1089 = vlaneseq
        %v1090 = vshrl.u32 %v1089, 7
        %v1091 = vsub.s32 0, %v1090
        %v1092 = vrot.slane %v1087, %v1091
        %v1094 = vadd.f32 %v1086, %v1092
        %vm1095 = vcmp.gt.f32.partialorder %v1094, 0.0
        %v1096 = vmin.f32 %v1094, 0.0
        %v1097 = vmul.f32 %v1096, 1.442695
        %v1098 = vpow.pop %v1097
        %v1099 = vsub.f32 %v1098, 1.0
        %v1100 = vsel %vm1095, %v1094, %v1099
        %vm1101 = vcmp.eq.s32.totalorder %v993, 0
        %vm1102 = vcmask 1047808
        %1103 = vrot.lane.b32.xlu0 %v1100, 32
        %v1104 = vpop.permute.xlu0 %1103
        %v1105 = vsel %vm1102, %v1104, %v1100
        %1106 = vrot.lane.b32.xlu0 %v1105, 32
        %v1107 = vpop.permute.xlu0 %1106
        %v1108 = vsel %vm1102, %v1107, %v1100
        %1110 = vrot.lane.b32.xlu0 %v1108, 97
        %v1111 = vpop.permute.xlu0 %1110
        %v1113 = vsel %vm1101, 0.0, %v1111
        %vm1114 = vcmp.eq.s32.totalorder %v993, 31
        %1115 = vrot.lane.b32.xlu0 %v1108, 127
        %v1116 = vpop.permute.xlu0 %1115
        %v1118 = vsel %vm1114, 0.0, %v1116
        %v1119 = vld [vmem:[%s5] sm:$0xff]
        %v1120 = vld [vmem:[%s5 + $0x8] sm:$0xff]
        %vm1121 = vcmask 195584
        %v1123 = vsel %vm1121, %v1119, 0
        %v1126 = vsel %vm1121, %v1120, 0
        %1128 = vmatprep.subr.mxu0 0.0
        %1129 = vmatpush1.msra.mxu0 %v1113
        %1130 = vmatprep.subr.mxu0 0.0
        %1131 = vmatpush1.msra.mxu0 %v1100
        %1132 = vmatprep.subr.mxu0 0.0
        %1133 = vmatpush1.msra.mxu0 %v1118
        %1134 = vmatprep.subr.mxu0 0.0
        %1135 = vmatpush1.msra.mxu0 0.0
        %1136 = vmatprep.subr.mxu0 0.0
        %1137 = vmatpush1.msra.mxu0 0.0
        %1138 = vmatprep.subr.mxu0 0.0
        %1139 = vmatpush1.msra.mxu0 0.0
        %1140 = vmatprep.subr.mxu0 0.0
        %1141 = vmatpush1.msra.mxu0 0.0
        %1142 = vmatprep.subr.mxu0 0.0
        %1143 = vmatpush1.msra.mxu0 0.0
        %1144 = vmatprep.subr.mxu0 0.0
        %1145 = vmatpush1.msra.mxu0 0.0
        %1146 = vmatprep.subr.mxu0 0.0
        %1147 = vmatpush1.msra.mxu0 0.0
        %1148 = vmatprep.subr.mxu0 0.0
        %1149 = vmatpush1.msra.mxu0 0.0
        %1150 = vmatprep.subr.mxu0 0.0
        %1151 = vmatpush1.msra.mxu0 0.0
        %1152 = vmatprep.subr.mxu0 0.0
        %1153 = vmatpush1.msra.mxu0 0.0
        %1154 = vmatprep.subr.mxu0 0.0
        %1155 = vmatpush1.msra.mxu0 0.0
        %1156 = vmatprep.subr.mxu0 0.0
        %1157 = vmatpush1.msra.mxu0 0.0
        %1158 = vmatprep.subr.mxu0 0.0
        %1159 = vmatpush1.msra.mxu0 0.0
        %1160 = vmatprep.subr.mxu0 0.0
        %1161 = vmatpush1.msra.mxu0 0.0
        %1162 = vmatprep.subr.mxu0 0.0
        %1163 = vmatpush1.msra.mxu0 0.0
        %1164 = vmatprep.subr.mxu0 0.0
        %1165 = vmatpush1.msra.mxu0 0.0
        %1166 = vmatprep.subr.mxu0 0.0
        %1167 = vmatpush1.msra.mxu0 0.0
        %1168 = vmatprep.subr.mxu0 0.0
        %1169 = vmatpush1.msra.mxu0 0.0
        %1170 = vmatprep.subr.mxu0 0.0
        %1171 = vmatpush1.msra.mxu0 0.0
        %1172 = vmatprep.subr.mxu0 0.0
        %1173 = vmatpush1.msra.mxu0 0.0
        %1174 = vmatprep.subr.mxu0 0.0
        %1175 = vmatpush1.msra.mxu0 0.0
        %1176 = vmatprep.subr.mxu0 0.0
        %1177 = vmatpush1.msra.mxu0 0.0
        %1178 = vmatprep.subr.mxu0 0.0
        %1179 = vmatpush1.msra.mxu0 0.0
        %1180 = vmatprep.subr.mxu0 0.0
        %1181 = vmatpush1.msra.mxu0 0.0
        %1182 = vmatprep.subr.mxu0 0.0
        %1183 = vmatpush1.msra.mxu0 0.0
        %1184 = vmatprep.subr.mxu0 0.0
        %1185 = vmatpush1.msra.mxu0 0.0
        %1186 = vmatprep.subr.mxu0 0.0
        %1187 = vmatpush1.msra.mxu0 0.0
        %1188 = vmatprep.subr.mxu0 0.0
        %1189 = vmatpush1.msra.mxu0 0.0
        %1190 = vmatprep.subr.mxu0 0.0
        %1191 = vmatpush1.msra.mxu0 0.0
        %1192 = vmatprep.mubr.f32.mxu0 0.0
        %1193 = vmatmul.mubr.f32.gmra.mrb[0].mxu0 %v1123
        %v1194 = vpop.f32.mrb[0].mxu0
        %v1195 = vadd.f32 0.0, %v1194
        %v1196 = vpop.f32.mrb[0].mxu0
        %1197 = vmatprep.mubr.f32.mxu0 0.0
        %1198 = vmatmul.mubr.f32.gmra.mrb[0].mxu0 %v1126
        %v1199 = vpop.f32.mrb[0].mxu0
        %v1200 = vadd.f32 0.0, %v1199
        %v1201 = vpop.f32.mrb[0].mxu0
        %1202 = vdwg.mxu0
        %vm1203 = vcmask 254976
        %1204 = vst.msk [vmem:[%s486] sm:$0x3] %vm1203, %v1195
        %1205 = vst.msk [vmem:[%s493] sm:$0x3] %vm1203, %v1200
        %v1206 = vmul.f32 %v736, %v1195
        %v1209 = vunpack.c.l.s4 1966171168
        %v1210 = vunpack.c.0.s8 %v1209
        %v1211 = vlaneseq
        %v1212 = vshrl.u32 %v1211, 7
        %v1213 = vsub.s32 %v1210, %v1212
        %v1214 = vrot.slane %v1206, %v1213
        %v1215 = vcombine.high %v1214, %v1214
        %v1217 = vunpack.c.l.s4 1966171168
        %v1218 = vunpack.c.0.s8 %v1217
        %v1219 = vlaneseq
        %v1220 = vshrl.u32 %v1219, 7
        %v1221 = vsub.s32 %v1218, %v1220
        %v1222 = vrot.slane %v1214, %v1221
        %v1224 = vunpack.c.l.s4 1966171168
        %v1225 = vunpack.c.0.s8 %v1224
        %v1226 = vlaneseq
        %v1227 = vshrl.u32 %v1226, 7
        %v1228 = vsub.s32 %v1225, %v1227
        %v1229 = vrot.slane %v1215, %v1228
        %v1230 = vlaneseq
        %v1231 = vshrl.u32 %v1230, 7
        %v1232 = vsub.s32 0, %v1231
        %v1233 = vrot.slane %v1222, %v1232
        %v1234 = vlaneseq
        %v1235 = vshrl.u32 %v1234, 7
        %v1236 = vsub.s32 0, %v1235
        %v1237 = vrot.slane %v1229, %v1236
        %v1240 = vmul.f32 %v771, %v1200
        %v1243 = vunpack.c.l.s4 1966171168
        %v1244 = vunpack.c.0.s8 %v1243
        %v1245 = vlaneseq
        %v1246 = vshrl.u32 %v1245, 7
        %v1247 = vsub.s32 %v1244, %v1246
        %v1248 = vrot.slane %v1240, %v1247
        %v1249 = vcombine.high %v1248, %v1248
        %v1251 = vunpack.c.l.s4 1966171168
        %v1252 = vunpack.c.0.s8 %v1251
        %v1253 = vlaneseq
        %v1254 = vshrl.u32 %v1253, 7
        %v1255 = vsub.s32 %v1252, %v1254
        %v1256 = vrot.slane %v1248, %v1255
        %v1258 = vunpack.c.l.s4 1966171168
        %v1259 = vunpack.c.0.s8 %v1258
        %v1260 = vlaneseq
        %v1261 = vshrl.u32 %v1260, 7
        %v1262 = vsub.s32 %v1259, %v1261
        %v1263 = vrot.slane %v1249, %v1262
        %v1264 = vlaneseq
        %v1265 = vshrl.u32 %v1264, 7
        %v1266 = vsub.s32 0, %v1265
        %v1267 = vrot.slane %v1256, %v1266
        %v1268 = vlaneseq
        %v1269 = vshrl.u32 %v1268, 7
        %v1270 = vsub.s32 0, %v1269
        %v1271 = vrot.slane %v1263, %v1270
        %1274 = vst.msk [vmem:[%s472 + $0x8] sm:$0xff] %vm508, %v1233
        %1275 = vst.msk [vmem:[%s472 + $0x10] sm:$0xff] %vm508, %v1237
        %1276 = vst.msk [vmem:[%s479 + $0x8] sm:$0xff] %vm508, %v1267
        %1277 = vst.msk [vmem:[%s479 + $0x10] sm:$0xff] %vm508, %v1271
        %s1278 = sand.u32 %s223, 1
        %s1279 = scalar_lea.sflag [#allocation3], %s1278
        %s1280 = sand.u32 %s223, 1
        %s1281 = smul.addr %s1280, 32
        %s1282 = scalar_lea.vmem [#allocation2], %s1281
        %s1283 = sand.u32 %s37, 1
        %s1284 = scalar_lea.sflag [#allocation5], %s1283
        %s1285 = sand.u32 %s249, 1
        %s1286 = smul.addr %s1285, 24
        %s1287 = scalar_lea.vmem [#allocation4], %s1286
        %s1288 = sand.u32 %s37, 1
        %s1289 = scalar_lea.sflag [#allocation5], %s1288
        %s1290 = sand.u32 %s275, 1
        %s1291 = smul.addr %s1290, 24
        %s1292 = scalar_lea.vmem [#allocation6], %s1291
        %s1293 = sand.u32 %s37, 1
        %s1294 = scalar_lea.sflag [#allocation8], %s1293
        %s1295 = sand.u32 %s301, 1
        %s1296 = smul.addr %s1295, 24
        %s1297 = scalar_lea.vmem [#allocation7], %s1296
        %s1298 = sand.u32 %s37, 1
        %s1299 = scalar_lea.sflag [#allocation8], %s1298
        %s1300 = sand.u32 %s327, 1
        %s1301 = smul.addr %s1300, 2
        %s1302 = scalar_lea.vmem [#allocation9], %s1301
        %s1303 = sand.u32 %s353, 1
        %s1304 = scalar_lea.sflag [#allocation11], %s1303
        %s1305 = sand.u32 %s353, 1
        %s1306 = smul.addr %s1305, 2
        %s1307 = scalar_lea.vmem [#allocation10], %s1306
        // Predicated region
        $region53: #{distribution_block_forward.1} parent=51 // pred_check
          %p1308 = pneg %p233
        $region54: #{distribution_block_forward.1} parent=51 // pred_check_branch
          %1310 = sbr.rel (%p1308) target = $region56
        $region55: #{distribution_block_forward.1} parent=51 // pred_region
          %s1312 = ssub.s32 512, 512
          %1313 = vsyncadd %s1279, %s1312
          %s1314 = smul.addr %s37, 4
          %s1315 = smul.addr %s1314, 128
          %s1316 = scalar_lea.hbm %s8, %s1315
          %s1317 = sshll.u32 %s1282, 4
          %s1318 = int_to_ptr.vmem [resolvable:$true] %s1317
          %1323 = dma.vmem_to_hbm [thread:$0]  %s1318, 512, %s1316, %s1279, 128, 128, 8
        $region56: #{distribution_block_forward.1} parent=51 // pred_fallthru
          _
        // Predicated region
        $region57: #{distribution_block_forward.1} parent=51 // pred_check
          %p1324 = pneg %p259
        $region58: #{distribution_block_forward.1} parent=51 // pred_check_branch
          %1326 = sbr.rel (%p1324) target = $region60
        $region59: #{distribution_block_forward.1} parent=51 // pred_region
          %s1328 = ssub.s32 384, 384
          %1329 = vsyncadd %s1284, %s1328
          %s1330 = smul.addr %s37, 3
          %s1331 = smul.addr %s1330, 128
          %s1332 = scalar_lea.hbm %s9, %s1331
          %s1333 = sshll.u32 %s1287, 4
          %s1334 = int_to_ptr.vmem [resolvable:$true] %s1333
          %1339 = dma.vmem_to_hbm [thread:$0]  %s1334, 384, %s1332, %s1284, 128, 128, 8
        $region60: #{distribution_block_forward.1} parent=51 // pred_fallthru
          _
        // Predicated region
        $region61: #{distribution_block_forward.1} parent=51 // pred_check
          %p1340 = pneg %p285
        $region62: #{distribution_block_forward.1} parent=51 // pred_check_branch
          %1342 = sbr.rel (%p1340) target = $region64
        $region63: #{distribution_block_forward.1} parent=51 // pred_region
          %s1344 = ssub.s32 384, 384
          %1345 = vsyncadd %s1289, %s1344
          %s1346 = smul.addr %s37, 3
          %s1347 = smul.addr %s1346, 128
          %s1348 = scalar_lea.hbm %s10, %s1347
          %s1349 = sshll.u32 %s1292, 4
          %s1350 = int_to_ptr.vmem [resolvable:$true] %s1349
          %1355 = dma.vmem_to_hbm [thread:$0]  %s1350, 384, %s1348, %s1289, 128, 128, 8
        $region64: #{distribution_block_forward.1} parent=51 // pred_fallthru
          _
        // Predicated region
        $region65: #{distribution_block_forward.1} parent=51 // pred_check
          %p1356 = pneg %p311
        $region66: #{distribution_block_forward.1} parent=51 // pred_check_branch
          %1358 = sbr.rel (%p1356) target = $region68
        $region67: #{distribution_block_forward.1} parent=51 // pred_region
          %s1360 = ssub.s32 384, 384
          %1361 = vsyncadd %s1294, %s1360
          %s1362 = smul.addr %s37, 3
          %s1363 = smul.addr %s1362, 128
          %s1364 = scalar_lea.hbm %s11, %s1363
          %s1365 = sshll.u32 %s1297, 4
          %s1366 = int_to_ptr.vmem [resolvable:$true] %s1365
          %1371 = dma.vmem_to_hbm [thread:$0]  %s1366, 384, %s1364, %s1294, 128, 128, 8
        $region68: #{distribution_block_forward.1} parent=51 // pred_fallthru
          _
        // Predicated region
        $region69: #{distribution_block_forward.1} parent=51 // pred_check
          %p1372 = pneg %p337
        $region70: #{distribution_block_forward.1} parent=51 // pred_check_branch
          %1374 = sbr.rel (%p1372) target = $region72
        $region71: #{distribution_block_forward.1} parent=51 // pred_region
          %s1376 = ssub.s32 32, 32
          %1377 = vsyncadd %s1299, %s1376
          %s1378 = smul.addr %s37, 32
          %s1379 = scalar_lea.hbm %s12, %s1378
          %s1381 = sshll.u32 %s1302, 4
          %s1382 = int_to_ptr.vmem [resolvable:$true] %s1381
          %1384 = dma.vmem_to_hbm [thread:$0]  %s1382, 32, %s1379, %s1299
        $region72: #{distribution_block_forward.1} parent=51 // pred_fallthru
          _
        // Predicated region
        $region73: #{distribution_block_forward.1} parent=51 // pred_check
          %p1385 = pneg %p363
        $region74: #{distribution_block_forward.1} parent=51 // pred_check_branch
          %1387 = sbr.rel (%p1385) target = $region76
        $region75: #{distribution_block_forward.1} parent=51 // pred_region
          %s1389 = ssub.s32 32, 32
          %1390 = vsyncadd %s1304, %s1389
          %s1391 = smul.addr %s37, 32
          %s1392 = scalar_lea.hbm %s13, %s1391
          %s1394 = sshll.u32 %s1307, 4
          %s1395 = int_to_ptr.vmem [resolvable:$true] %s1394
          %1397 = dma.vmem_to_hbm [thread:$0]  %s1395, 32, %s1392, %s1304
        $region76: #{distribution_block_forward.1} parent=51 // pred_fallthru
          _
      $region52: #{distribution_block_forward.1} parent=5 // pred_fallthru
        _
      %p1398 = scmp.le.s32.totalorder 2, %s32
      // Predicated region
      $region77: #{distribution_block_forward.1} parent=5 // pred_check
        %p1399 = pneg %p1398
      $region78: #{distribution_block_forward.1} parent=5 // pred_check_branch
        %1401 = sbr.rel (%p1399) target = $region80
      $region79: #{distribution_block_forward.1} parent=5 // pred_region
        %s1402 = ssub.s32 %s32, 2
        // Predicated region
        $region81: #{distribution_block_forward.1} parent=79 // pred_check
          %p1403 = pneg %p239
        $region82: #{distribution_block_forward.1} parent=79 // pred_check_branch
          %1405 = sbr.rel (%p1403) target = $region84
        $region83: #{distribution_block_forward.1} parent=79 // pred_region
          %s1406 = sand.u32 %s224, 1
          %s1407 = scalar_lea.sflag [#allocation3], %s1406
          %s1408 = sand.u32 %s224, 1
          %s1409 = smul.addr %s1408, 32
          %s1410 = scalar_lea.vmem [#allocation2], %s1409
          %1411 = dma.done %s1407, 512
        $region84: #{distribution_block_forward.1} parent=79 // pred_fallthru
          _
        // Predicated region
        $region85: #{distribution_block_forward.1} parent=79 // pred_check
          %p1412 = pneg %p265
        $region86: #{distribution_block_forward.1} parent=79 // pred_check_branch
          %1414 = sbr.rel (%p1412) target = $region88
        $region87: #{distribution_block_forward.1} parent=79 // pred_region
          %s1415 = sand.u32 %s38, 1
          %s1416 = scalar_lea.sflag [#allocation5], %s1415
          %s1417 = sand.u32 %s250, 1
          %s1418 = smul.addr %s1417, 24
          %s1419 = scalar_lea.vmem [#allocation4], %s1418
          %1420 = dma.done %s1416, 384
        $region88: #{distribution_block_forward.1} parent=79 // pred_fallthru
          _
        // Predicated region
        $region89: #{distribution_block_forward.1} parent=79 // pred_check
          %p1421 = pneg %p291
        $region90: #{distribution_block_forward.1} parent=79 // pred_check_branch
          %1423 = sbr.rel (%p1421) target = $region92
        $region91: #{distribution_block_forward.1} parent=79 // pred_region
          %s1424 = sand.u32 %s38, 1
          %s1425 = scalar_lea.sflag [#allocation5], %s1424
          %s1426 = sand.u32 %s276, 1
          %s1427 = smul.addr %s1426, 24
          %s1428 = scalar_lea.vmem [#allocation6], %s1427
          %1429 = dma.done %s1425, 384
        $region92: #{distribution_block_forward.1} parent=79 // pred_fallthru
          _
        // Predicated region
        $region93: #{distribution_block_forward.1} parent=79 // pred_check
          %p1430 = pneg %p317
        $region94: #{distribution_block_forward.1} parent=79 // pred_check_branch
          %1432 = sbr.rel (%p1430) target = $region96
        $region95: #{distribution_block_forward.1} parent=79 // pred_region
          %s1433 = sand.u32 %s38, 1
          %s1434 = scalar_lea.sflag [#allocation8], %s1433
          %s1435 = sand.u32 %s302, 1
          %s1436 = smul.addr %s1435, 24
          %s1437 = scalar_lea.vmem [#allocation7], %s1436
          %1438 = dma.done %s1434, 384
        $region96: #{distribution_block_forward.1} parent=79 // pred_fallthru
          _
        // Predicated region
        $region97: #{distribution_block_forward.1} parent=79 // pred_check
          %p1439 = pneg %p343
        $region98: #{distribution_block_forward.1} parent=79 // pred_check_branch
          %1441 = sbr.rel (%p1439) target = $region100
        $region99: #{distribution_block_forward.1} parent=79 // pred_region
          %s1442 = sand.u32 %s38, 1
          %s1443 = scalar_lea.sflag [#allocation8], %s1442
          %s1444 = sand.u32 %s328, 1
          %s1445 = smul.addr %s1444, 2
          %s1446 = scalar_lea.vmem [#allocation9], %s1445
          %1447 = dma.done %s1443, 32
        $region100: #{distribution_block_forward.1} parent=79 // pred_fallthru
          _
        // Predicated region
        $region101: #{distribution_block_forward.1} parent=79 // pred_check
          %p1448 = pneg %p369
        $region102: #{distribution_block_forward.1} parent=79 // pred_check_branch
          %1450 = sbr.rel (%p1448) target = $region104
        $region103: #{distribution_block_forward.1} parent=79 // pred_region
          %s1451 = sand.u32 %s354, 1
          %s1452 = scalar_lea.sflag [#allocation11], %s1451
          %s1453 = sand.u32 %s354, 1
          %s1454 = smul.addr %s1453, 2
          %s1455 = scalar_lea.vmem [#allocation10], %s1454
          %1456 = dma.done %s1452, 32
        $region104: #{distribution_block_forward.1} parent=79 // pred_fallthru
          _
      $region80: #{distribution_block_forward.1} parent=5 // pred_fallthru
        _
    $region6: #{distribution_block_forward.1} parent=1 // loop_footer
      %s36 = sadd.s32 1, %s32
    $region7: #{distribution_block_forward.1} parent=1 // loop_footer_branch
      %31 = sbr.rel target = $region3
    $region8: #{distribution_block_forward.1} parent=1 // loop_exit
      _
    %1457 = vsyncpa [#allocation3], 1
    %s1458 = scalar_lea.sflag [#allocation3], 1
    %1459 = vsyncpa %s1458, 1
    %1460 = vsyncpa [#allocation5], 1
    %s1461 = scalar_lea.sflag [#allocation5], 1
    %1462 = vsyncpa %s1461, 1
    %1463 = vsyncpa [#allocation8], 1
    %s1464 = scalar_lea.sflag [#allocation8], 1
    %1465 = vsyncpa %s1464, 1
    %1466 = vsyncpa [#allocation11], 1
    %s1467 = scalar_lea.sflag [#allocation11], 1
    %1468 = vsyncpa %s1467, 1

</llo_original>
